<compile_context>
chip_gen: v7x
topology: tpu7x:2x2x1
jax: 0.10.0
libtpu: 0.0.40
codegen_flags: <defaults>
</compile_context>

<pallas_src>
import functools

import jax
import jax.numpy as jnp
from jax.experimental import pallas as pl
from jax.experimental.pallas import tpu as pltpu


def _decoder_kernel(n_layers,
                    enc_ref, h0_ref, c0_ref, emb_ref,
                    wh_t_ref, we_t_ref, attn_b_ref, v_ref,
                    w_ih_emb_ref, w_ih_ctx_ref, w_ihr_ref, w_hh_ref, b_lstm_ref,
                    out_w_ref, out_b_ref,
                    out_ref, hn_ref, cn_ref):
    enc = enc_ref[...]                       # (B, S, H)
    B, S, H = enc.shape
    L = n_layers

    # ---------------- additive attention: two fused MXU matmuls --------------
    # score_{b,s} = v . (W_h h_b + b + W_e e_{b,s})
    #             = (W_h h_b + b) . v  +  (e_{b,s} @ W_e^T) . v   (distributes)
    h_top = h0_ref[0]                        # last_hidden[0][0] -> (B, H)
    v = v_ref[...]                           # (1, H)

    base = jnp.dot(h_top, wh_t_ref[...], preferred_element_type=jnp.float32) \
           + attn_b_ref[...]                                          # (B, H)
    base_score = jnp.dot(base, v.T, preferred_element_type=jnp.float32)  # (B, 1)

    enc2d = enc.reshape(B * S, H)                                     # (B*S, H)
    enc_energy = jnp.dot(enc2d, we_t_ref[...],
                         preferred_element_type=jnp.float32)          # (B*S, H)
    enc_score = jnp.dot(enc_energy, v.T,
                        preferred_element_type=jnp.float32).reshape(B, S)
    scores = enc_score + base_score                                   # (B, S)

    # softmax over the sequence axis
    m = jnp.max(scores, axis=1, keepdims=True)
    e = jnp.exp(scores - m)
    attn_w = e / jnp.sum(e, axis=1, keepdims=True)                    # (B, S)

    # context = attn_w.unsqueeze(1).bmm(encoder_outputs).squeeze()
    # one broadcast-multiply + sublane reduce (no per-step slicing)
    ctx = jnp.sum(attn_w[:, :, None] * enc, axis=1)                   # (B, H)

    # ---------------- 4-layer LSTM, single timestep ---------------------------
    emb = emb_ref[...]                                                # (B, E)

    # recurrent contributions are independent of the serial layer chain:
    # issue all L of them (plus bias) up front so MXU latency overlaps.
    hh = [jnp.dot(h0_ref[l], w_hh_ref[l], preferred_element_type=jnp.float32)
          + b_lstm_ref[l]
          for l in range(L)]                                          # L x (B, 4H)

    # layer-0 input projection: [emb ; ctx] concat replaced by two summed matmuls
    gates0 = (jnp.dot(emb, w_ih_emb_ref[...], preferred_element_type=jnp.float32)
              + jnp.dot(ctx, w_ih_ctx_ref[...], preferred_element_type=jnp.float32)
              + hh[0])                                                # (B, 4H)

    h_parts, c_parts = [], []
    x = None
    for l in range(L):
        if l == 0:
            gates = gates0
        else:
            gates = jnp.dot(x, w_ihr_ref[l - 1],
                            preferred_element_type=jnp.float32) + hh[l]
        # gate columns pre-permuted to [i, f, o, g]:
        sig = jax.nn.sigmoid(gates[:, :3 * H])      # one wide EUP sigmoid
        g_g = jnp.tanh(gates[:, 3 * H:])            # one tanh
        i_g = sig[:, 0 * H:1 * H]
        f_g = sig[:, 1 * H:2 * H]
        o_g = sig[:, 2 * H:3 * H]
        c_new = f_g * c0_ref[l] + i_g * g_g
        h_new = o_g * jnp.tanh(c_new)
        h_parts.append(h_new)
        c_parts.append(c_new)
        x = h_new  # inter-layer dropout(0.5) == identity in eval mode

    # lane-dense (B, L*H) output slabs -> single unmasked full-width stores
    hn_ref[...] = jnp.concatenate(h_parts, axis=1)
    cn_ref[...] = jnp.concatenate(c_parts, axis=1)

    # ---------------- output projection ---------------------------------------
    out_ref[...] = jnp.dot(x, out_w_ref[...],
                           preferred_element_type=jnp.float32) + out_b_ref[...]


def attn_decoder_forward(word_input, last_hidden, encoder_outputs, params):
    """Pallas-backed forward. Returns (output (B,1,O), (h_n, c_n))."""
    h0, c0 = last_hidden                     # each (L, B, H)
    L, B, H = h0.shape
    _, S, _ = encoder_outputs.shape
    E = params["emb_w"].shape[1]
    O = params["out_w_t"].shape[1]

    # ---- wrapper-side glue (cheap layout plumbing, not worth kernel time) ----
    # embedding gather instead of an in-kernel one-hot matmul
    idx = word_input.reshape(-1)                                  # word_input.squeeze()
    emb = params["emb_w"][idx].astype(jnp.float32)                # (B, E)

    # permute LSTM gate columns from PyTorch order [i, f, g, o] to [i, f, o, g]
    # so the kernel applies one sigmoid over lanes [0:3H) and one tanh over [3H:4H)
    def reorder(w):  # w: (..., 4H)
        return jnp.concatenate([w[..., :2 * H], w[..., 3 * H:], w[..., 2 * H:3 * H]],
                               axis=-1)

    w_ih0 = reorder(params["w_ih0_t"])                            # (E+H, 4H)
    w_ih_emb = w_ih0[:E]                                          # (E, 4H)
    w_ih_ctx = w_ih0[E:]                                          # (H, 4H)
    w_ihr = reorder(params["w_ihr_t"])                            # (L-1, H, 4H)
    w_hh = reorder(params["w_hh_t"])                              # (L, H, 4H)
    b_lstm = reorder(params["b_lstm"])                            # (L, 1, 4H)

    kernel = functools.partial(_decoder_kernel, L)

    inputs = (
        encoder_outputs.astype(jnp.float32), h0, c0, emb,
        params["attn_wh_t"], params["attn_we_t"], params["attn_b"], params["v"],
        w_ih_emb, w_ih_ctx, w_ihr, w_hh, b_lstm,
        params["out_w_t"], params["out_b"],
    )

    vmem = pl.BlockSpec(memory_space=pltpu.MemorySpace.VMEM)
    out, hn_slab, cn_slab = pl.pallas_call(
        kernel,
        out_shape=(
            jax.ShapeDtypeStruct((B, O), jnp.float32),
            jax.ShapeDtypeStruct((B, L * H), jnp.float32),   # lane-dense slab
            jax.ShapeDtypeStruct((B, L * H), jnp.float32),   # lane-dense slab
        ),
        in_specs=[vmem] * len(inputs),
        out_specs=(vmem, vmem, vmem),
        compiler_params=pltpu.CompilerParams(vmem_limit_bytes=32 * 1024 * 1024),
    )(*inputs)

    # unpack the (B, L*H) slabs back into PyTorch's (L, B, H) layout
    h_n = hn_slab.reshape(B, L, H).transpose(1, 0, 2)
    c_n = cn_slab.reshape(B, L, H).transpose(1, 0, 2)

    # PyTorch: output has shape (B, 1, O) when batch > 1 (squeeze(0) is a no-op)
    return out.reshape(B, 1, O), (h_n, c_n)


def _reference_forward(word_input, last_hidden, encoder_outputs, params):
    """Pure-JAX reference mirroring the PyTorch forward (for a sanity check)."""
    h0, c0 = last_hidden
    L, B, H = h0.shape

    h_top = h0[0]
    base = h_top @ params["attn_wh_t"] + params["attn_b"]
    energy = base[:, None, :] + jnp.einsum("bsh,hk->bsk",
                                           encoder_outputs, params["attn_we_t"])
    scores = jnp.sum(energy * params["v"][0][None, None, :], axis=-1)   # (B, S)
    attn_w = jax.nn.softmax(scores, axis=1)
    ctx = jnp.einsum("bs,bsh->bh", attn_w, encoder_outputs)

    emb = params["emb_w"][word_input.reshape(-1)]
    x = jnp.concatenate([emb, ctx], axis=1)

    hs, cs = [], []
    for l in range(L):
        w_ih = params["w_ih0_t"] if l == 0 else params["w_ihr_t"][l - 1]
        gates = x @ w_ih + h0[l] @ params["w_hh_t"][l] + params["b_lstm"][l]
        i_g = jax.nn.sigmoid(gates[:, :H])
        f_g = jax.nn.sigmoid(gates[:, H:2 * H])
        g_g = jnp.tanh(gates[:, 2 * H:3 * H])
        o_g = jax.nn.sigmoid(gates[:, 3 * H:])
        c_new = f_g * c0[l] + i_g * g_g
        h_new = o_g * jnp.tanh(c_new)
        hs.append(h_new); cs.append(c_new)
        x = h_new
    out = x @ params["out_w_t"] + params["out_b"]
    return out.reshape(B, 1, -1), (jnp.stack(hs), jnp.stack(cs))


def make_params(key, hidden_size, embedding_size, input_size, output_size,
                n_layers):
    """Deterministic synthetic parameters (shapes follow the PyTorch __init__)."""
    ks = iter(jax.random.split(key, 32))
    def rnd(shape, scale=0.1):
        return (scale * jax.random.normal(next(ks), shape)).astype(jnp.float32)

    H, E, V, O, L = hidden_size, embedding_size, input_size, output_size, n_layers

    # Attn: nn.Linear(2H, H) weight (H, 2H) -> split & transpose; v (H,)
    attn_w = rnd((H, 2 * H))
    params = {
        "emb_w":     rnd((V, E)),                      # nn.Embedding(V, E)
        "attn_wh_t": attn_w[:, :H].T,                  # hidden half, (H, H)
        "attn_we_t": attn_w[:, H:].T,                  # encoder half, (H, H)
        "attn_b":    rnd((1, H)),
        "v":         rnd((1, H)),
        # LSTM(E+H -> H, n_layers). PyTorch weight_ih_l0: (4H, E+H), others (4H, H)
        "w_ih0_t":   rnd((4 * H, E + H)).T,            # (E+H, 4H)
        "w_ihr_t":   jnp.stack([rnd((4 * H, H)).T for _ in range(L - 1)]),
        "w_hh_t":    jnp.stack([rnd((4 * H, H)).T for _ in range(L)]),
        # combined bias b_ih + b_hh, kept 2D per layer for TPU-friendly layout
        "b_lstm":    jnp.stack([(rnd((4 * H,)) + rnd((4 * H,))).reshape(1, 4 * H)
                                for _ in range(L)]),
        # nn.Linear(H, O): weight (O, H) -> transpose
        "out_w_t":   rnd((O, H)).T,                    # (H, O)
        "out_b":     rnd((1, O)),
    }
    return params


if __name__ == "__main__":
    # small, module-consistent shapes
    hidden_size = 32
    embedding_size = 32
    input_size = 16       # vocab
    output_size = 16
    n_layers = 4
    batch = 2
    seq_len = 8

    key = jax.random.PRNGKey(0)
    k_p, k_w, k_h, k_c, k_e = jax.random.split(key, 5)

    params = make_params(k_p, hidden_size, embedding_size, input_size,
                         output_size, n_layers)

    word_input = jax.random.randint(k_w, (batch, 1), 0, input_size,
                                    dtype=jnp.int32)
    last_hidden = (
        0.1 * jax.random.normal(k_h, (n_layers, batch, hidden_size),
                                dtype=jnp.float32),
        0.1 * jax.random.normal(k_c, (n_layers, batch, hidden_size),
                                dtype=jnp.float32),
    )
    encoder_outputs = 0.1 * jax.random.normal(
        k_e, (batch, seq_len, hidden_size), dtype=jnp.float32)

    out, (h_n, c_n) = attn_decoder_forward(word_input, last_hidden,
                                           encoder_outputs, params)
    jax.block_until_ready((out, h_n, c_n))

    # sanity check against a pure-JAX reference
    ref_out, (ref_h, ref_c) = _reference_forward(word_input, last_hidden,
                                                 encoder_outputs, params)
    assert out.shape == (batch, 1, output_size)
    assert h_n.shape == (n_layers, batch, hidden_size)
    assert c_n.shape == (n_layers, batch, hidden_size)
    assert jnp.allclose(out, ref_out, atol=2e-3, rtol=2e-3)
    assert jnp.allclose(h_n, ref_h, atol=2e-3, rtol=2e-3)
    assert jnp.allclose(c_n, ref_c, atol=2e-3, rtol=2e-3)

    print("KERNEL_OK")
</pallas_src>

<mosaic_0001>
module attributes {stable_mosaic.version = 11 : i64} {
  func.func @_decoder_kernel(%arg0: memref<2x8x32xf32, #tpu.memory_space<vmem>>, %arg1: memref<4x2x32xf32, #tpu.memory_space<vmem>>, %arg2: memref<4x2x32xf32, #tpu.memory_space<vmem>>, %arg3: memref<2x32xf32, #tpu.memory_space<vmem>>, %arg4: memref<32x32xf32, #tpu.memory_space<vmem>>, %arg5: memref<32x32xf32, #tpu.memory_space<vmem>>, %arg6: memref<1x32xf32, #tpu.memory_space<vmem>>, %arg7: memref<1x32xf32, #tpu.memory_space<vmem>>, %arg8: memref<32x128xf32, #tpu.memory_space<vmem>>, %arg9: memref<32x128xf32, #tpu.memory_space<vmem>>, %arg10: memref<3x32x128xf32, #tpu.memory_space<vmem>>, %arg11: memref<4x32x128xf32, #tpu.memory_space<vmem>>, %arg12: memref<4x1x128xf32, #tpu.memory_space<vmem>>, %arg13: memref<32x16xf32, #tpu.memory_space<vmem>>, %arg14: memref<1x16xf32, #tpu.memory_space<vmem>>, %arg15: memref<2x16xf32, #tpu.memory_space<vmem>>, %arg16: memref<2x128xf32, #tpu.memory_space<vmem>>, %arg17: memref<2x128xf32, #tpu.memory_space<vmem>>) attributes {dimension_semantics = [], scalar_prefetch = 0 : i64, scratch_operands = 0 : i64, tpu.core_type = #tpu.core_type<tc>} {
    %c0 = arith.constant 0 : index
    %c0_0 = arith.constant 0 : index
    %c0_1 = arith.constant 0 : index
    %0 = vector.load %arg0[%c0, %c0_0, %c0_1] : memref<2x8x32xf32, #tpu.memory_space<vmem>>, vector<2x8x32xf32>
    %c0_2 = arith.constant 0 : index
    %c0_3 = arith.constant 0 : index
    %c0_4 = arith.constant 0 : index
    %1 = vector.load %arg1[%c0_2, %c0_3, %c0_4] : memref<4x2x32xf32, #tpu.memory_space<vmem>>, vector<1x2x32xf32>
    %2 = vector.shape_cast %1 : vector<1x2x32xf32> to vector<2x32xf32>
    %c0_5 = arith.constant 0 : index
    %c0_6 = arith.constant 0 : index
    %3 = vector.load %arg7[%c0_5, %c0_6] : memref<1x32xf32, #tpu.memory_space<vmem>>, vector<1x32xf32>
    %c0_7 = arith.constant 0 : index
    %c0_8 = arith.constant 0 : index
    %4 = vector.load %arg4[%c0_7, %c0_8] : memref<32x32xf32, #tpu.memory_space<vmem>>, vector<32x32xf32>
    %cst = arith.constant dense<0.000000e+00> : vector<2x32xf32>
    %5 = tpu.matmul %2, %4, %cst {dimension_numbers = #tpu.dot_dimension_numbers<[1], [0], [0], [1], [0, 0, 1, 1], [], []>} : vector<2x32xf32>, vector<32x32xf32>, vector<2x32xf32> -> vector<2x32xf32>
    %c0_9 = arith.constant 0 : index
    %c0_10 = arith.constant 0 : index
    %6 = vector.load %arg6[%c0_9, %c0_10] : memref<1x32xf32, #tpu.memory_space<vmem>>, vector<1x32xf32>
    %7 = vector.broadcast %6 : vector<1x32xf32> to vector<2x32xf32>
    %8 = arith.addf %5, %7 : vector<2x32xf32>
    %9 = tpu.transpose %3, [1, 0] : vector<1x32xf32> -> vector<32x1xf32>
    %cst_11 = arith.constant dense<0.000000e+00> : vector<2x1xf32>
    %10 = tpu.matmul %8, %9, %cst_11 {dimension_numbers = #tpu.dot_dimension_numbers<[1], [0], [0], [1], [0, 0, 1, 1], [], []>} : vector<2x32xf32>, vector<32x1xf32>, vector<2x1xf32> -> vector<2x1xf32>
    %11 = vector.shape_cast %0 : vector<2x8x32xf32> to vector<16x32xf32>
    %c0_12 = arith.constant 0 : index
    %c0_13 = arith.constant 0 : index
    %12 = vector.load %arg5[%c0_12, %c0_13] : memref<32x32xf32, #tpu.memory_space<vmem>>, vector<32x32xf32>
    %cst_14 = arith.constant dense<0.000000e+00> : vector<16x32xf32>
    %13 = tpu.matmul %11, %12, %cst_14 {dimension_numbers = #tpu.dot_dimension_numbers<[1], [0], [0], [1], [0, 0, 1, 1], [], []>} : vector<16x32xf32>, vector<32x32xf32>, vector<16x32xf32> -> vector<16x32xf32>
    %14 = tpu.transpose %3, [1, 0] : vector<1x32xf32> -> vector<32x1xf32>
    %cst_15 = arith.constant dense<0.000000e+00> : vector<16x1xf32>
    %15 = tpu.matmul %13, %14, %cst_15 {dimension_numbers = #tpu.dot_dimension_numbers<[1], [0], [0], [1], [0, 0, 1, 1], [], []>} : vector<16x32xf32>, vector<32x1xf32>, vector<16x1xf32> -> vector<16x1xf32>
    %16 = vector.shape_cast %15 : vector<16x1xf32> to vector<2x8xf32>
    %17 = vector.broadcast %10 : vector<2x1xf32> to vector<2x8xf32>
    %18 = arith.addf %16, %17 : vector<2x8xf32>
    %cst_16 = arith.constant dense<0xFF800000> : vector<2xf32>
    %19 = vector.multi_reduction <maximumf>, %18, %cst_16 [1] : vector<2x8xf32> to vector<2xf32>
    %20 = vector.shape_cast %19 : vector<2xf32> to vector<2x1xf32>
    %21 = vector.broadcast %20 : vector<2x1xf32> to vector<2x8xf32>
    %22 = arith.subf %18, %21 : vector<2x8xf32>
    %23 = math.exp %22 : vector<2x8xf32>
    %cst_17 = arith.constant dense<0.000000e+00> : vector<2xf32>
    %24 = vector.multi_reduction <add>, %23, %cst_17 [1] : vector<2x8xf32> to vector<2xf32>
    %25 = vector.shape_cast %24 : vector<2xf32> to vector<2x1xf32>
    %26 = vector.broadcast %25 : vector<2x1xf32> to vector<2x8xf32>
    %27 = arith.divf %23, %26 : vector<2x8xf32>
    %28 = vector.shape_cast %27 : vector<2x8xf32> to vector<2x8x1xf32>
    %29 = vector.broadcast %28 : vector<2x8x1xf32> to vector<2x8x32xf32>
    %30 = arith.mulf %29, %0 : vector<2x8x32xf32>
    %cst_18 = arith.constant dense<0.000000e+00> : vector<2x32xf32>
    %31 = vector.multi_reduction <add>, %30, %cst_18 [1] : vector<2x8x32xf32> to vector<2x32xf32>
    %c0_19 = arith.constant 0 : index
    %c0_20 = arith.constant 0 : index
    %32 = vector.load %arg3[%c0_19, %c0_20] : memref<2x32xf32, #tpu.memory_space<vmem>>, vector<2x32xf32>
    %c0_21 = arith.constant 0 : index
    %c0_22 = arith.constant 0 : index
    %c0_23 = arith.constant 0 : index
    %33 = vector.load %arg1[%c0_21, %c0_22, %c0_23] : memref<4x2x32xf32, #tpu.memory_space<vmem>>, vector<1x2x32xf32>
    %34 = vector.shape_cast %33 : vector<1x2x32xf32> to vector<2x32xf32>
    %c0_24 = arith.constant 0 : index
    %c0_25 = arith.constant 0 : index
    %c0_26 = arith.constant 0 : index
    %35 = vector.load %arg11[%c0_24, %c0_25, %c0_26] : memref<4x32x128xf32, #tpu.memory_space<vmem>>, vector<1x32x128xf32>
    %36 = vector.shape_cast %35 : vector<1x32x128xf32> to vector<32x128xf32>
    %cst_27 = arith.constant dense<0.000000e+00> : vector<2x128xf32>
    %37 = tpu.matmul %34, %36, %cst_27 {dimension_numbers = #tpu.dot_dimension_numbers<[1], [0], [0], [1], [0, 0, 1, 1], [], []>} : vector<2x32xf32>, vector<32x128xf32>, vector<2x128xf32> -> vector<2x128xf32>
    %c0_28 = arith.constant 0 : index
    %c0_29 = arith.constant 0 : index
    %c0_30 = arith.constant 0 : index
    %38 = vector.load %arg12[%c0_28, %c0_29, %c0_30] : memref<4x1x128xf32, #tpu.memory_space<vmem>>, vector<1x1x128xf32>
    %39 = vector.shape_cast %38 : vector<1x1x128xf32> to vector<1x128xf32>
    %40 = vector.broadcast %39 : vector<1x128xf32> to vector<2x128xf32>
    %41 = arith.addf %37, %40 : vector<2x128xf32>
    %c1 = arith.constant 1 : index
    %c0_31 = arith.constant 0 : index
    %c0_32 = arith.constant 0 : index
    %42 = vector.load %arg1[%c1, %c0_31, %c0_32] : memref<4x2x32xf32, #tpu.memory_space<vmem>>, vector<1x2x32xf32>
    %43 = vector.shape_cast %42 : vector<1x2x32xf32> to vector<2x32xf32>
    %c1_33 = arith.constant 1 : index
    %c0_34 = arith.constant 0 : index
    %c0_35 = arith.constant 0 : index
    %44 = vector.load %arg11[%c1_33, %c0_34, %c0_35] : memref<4x32x128xf32, #tpu.memory_space<vmem>>, vector<1x32x128xf32>
    %45 = vector.shape_cast %44 : vector<1x32x128xf32> to vector<32x128xf32>
    %cst_36 = arith.constant dense<0.000000e+00> : vector<2x128xf32>
    %46 = tpu.matmul %43, %45, %cst_36 {dimension_numbers = #tpu.dot_dimension_numbers<[1], [0], [0], [1], [0, 0, 1, 1], [], []>} : vector<2x32xf32>, vector<32x128xf32>, vector<2x128xf32> -> vector<2x128xf32>
    %c1_37 = arith.constant 1 : index
    %c0_38 = arith.constant 0 : index
    %c0_39 = arith.constant 0 : index
    %47 = vector.load %arg12[%c1_37, %c0_38, %c0_39] : memref<4x1x128xf32, #tpu.memory_space<vmem>>, vector<1x1x128xf32>
    %48 = vector.shape_cast %47 : vector<1x1x128xf32> to vector<1x128xf32>
    %49 = vector.broadcast %48 : vector<1x128xf32> to vector<2x128xf32>
    %50 = arith.addf %46, %49 : vector<2x128xf32>
    %c2 = arith.constant 2 : index
    %c0_40 = arith.constant 0 : index
    %c0_41 = arith.constant 0 : index
    %51 = vector.load %arg1[%c2, %c0_40, %c0_41] : memref<4x2x32xf32, #tpu.memory_space<vmem>>, vector<1x2x32xf32>
    %52 = vector.shape_cast %51 : vector<1x2x32xf32> to vector<2x32xf32>
    %c2_42 = arith.constant 2 : index
    %c0_43 = arith.constant 0 : index
    %c0_44 = arith.constant 0 : index
    %53 = vector.load %arg11[%c2_42, %c0_43, %c0_44] : memref<4x32x128xf32, #tpu.memory_space<vmem>>, vector<1x32x128xf32>
    %54 = vector.shape_cast %53 : vector<1x32x128xf32> to vector<32x128xf32>
    %cst_45 = arith.constant dense<0.000000e+00> : vector<2x128xf32>
    %55 = tpu.matmul %52, %54, %cst_45 {dimension_numbers = #tpu.dot_dimension_numbers<[1], [0], [0], [1], [0, 0, 1, 1], [], []>} : vector<2x32xf32>, vector<32x128xf32>, vector<2x128xf32> -> vector<2x128xf32>
    %c2_46 = arith.constant 2 : index
    %c0_47 = arith.constant 0 : index
    %c0_48 = arith.constant 0 : index
    %56 = vector.load %arg12[%c2_46, %c0_47, %c0_48] : memref<4x1x128xf32, #tpu.memory_space<vmem>>, vector<1x1x128xf32>
    %57 = vector.shape_cast %56 : vector<1x1x128xf32> to vector<1x128xf32>
    %58 = vector.broadcast %57 : vector<1x128xf32> to vector<2x128xf32>
    %59 = arith.addf %55, %58 : vector<2x128xf32>
    %c3 = arith.constant 3 : index
    %c0_49 = arith.constant 0 : index
    %c0_50 = arith.constant 0 : index
    %60 = vector.load %arg1[%c3, %c0_49, %c0_50] : memref<4x2x32xf32, #tpu.memory_space<vmem>>, vector<1x2x32xf32>
    %61 = vector.shape_cast %60 : vector<1x2x32xf32> to vector<2x32xf32>
    %c3_51 = arith.constant 3 : index
    %c0_52 = arith.constant 0 : index
    %c0_53 = arith.constant 0 : index
    %62 = vector.load %arg11[%c3_51, %c0_52, %c0_53] : memref<4x32x128xf32, #tpu.memory_space<vmem>>, vector<1x32x128xf32>
    %63 = vector.shape_cast %62 : vector<1x32x128xf32> to vector<32x128xf32>
    %cst_54 = arith.constant dense<0.000000e+00> : vector<2x128xf32>
    %64 = tpu.matmul %61, %63, %cst_54 {dimension_numbers = #tpu.dot_dimension_numbers<[1], [0], [0], [1], [0, 0, 1, 1], [], []>} : vector<2x32xf32>, vector<32x128xf32>, vector<2x128xf32> -> vector<2x128xf32>
    %c3_55 = arith.constant 3 : index
    %c0_56 = arith.constant 0 : index
    %c0_57 = arith.constant 0 : index
    %65 = vector.load %arg12[%c3_55, %c0_56, %c0_57] : memref<4x1x128xf32, #tpu.memory_space<vmem>>, vector<1x1x128xf32>
    %66 = vector.shape_cast %65 : vector<1x1x128xf32> to vector<1x128xf32>
    %67 = vector.broadcast %66 : vector<1x128xf32> to vector<2x128xf32>
    %68 = arith.addf %64, %67 : vector<2x128xf32>
    %c0_58 = arith.constant 0 : index
    %c0_59 = arith.constant 0 : index
    %69 = vector.load %arg8[%c0_58, %c0_59] : memref<32x128xf32, #tpu.memory_space<vmem>>, vector<32x128xf32>
    %cst_60 = arith.constant dense<0.000000e+00> : vector<2x128xf32>
    %70 = tpu.matmul %32, %69, %cst_60 {dimension_numbers = #tpu.dot_dimension_numbers<[1], [0], [0], [1], [0, 0, 1, 1], [], []>} : vector<2x32xf32>, vector<32x128xf32>, vector<2x128xf32> -> vector<2x128xf32>
    %c0_61 = arith.constant 0 : index
    %c0_62 = arith.constant 0 : index
    %71 = vector.load %arg9[%c0_61, %c0_62] : memref<32x128xf32, #tpu.memory_space<vmem>>, vector<32x128xf32>
    %cst_63 = arith.constant dense<0.000000e+00> : vector<2x128xf32>
    %72 = tpu.matmul %31, %71, %cst_63 {dimension_numbers = #tpu.dot_dimension_numbers<[1], [0], [0], [1], [0, 0, 1, 1], [], []>} : vector<2x32xf32>, vector<32x128xf32>, vector<2x128xf32> -> vector<2x128xf32>
    %73 = arith.addf %70, %72 : vector<2x128xf32>
    %74 = arith.addf %73, %41 : vector<2x128xf32>
    %75 = vector.extract_strided_slice %74 {offsets = [0, 0], sizes = [2, 96], strides = [1, 1]} : vector<2x128xf32> to vector<2x96xf32>
    %76 = arith.negf %75 : vector<2x96xf32>
    %77 = math.exp %76 : vector<2x96xf32>
    %cst_64 = arith.constant 1.000000e+00 : f32
    %78 = vector.broadcast %cst_64 : f32 to vector<2x96xf32>
    %79 = arith.addf %78, %77 : vector<2x96xf32>
    %80 = arith.divf %78, %79 : vector<2x96xf32>
    %81 = vector.extract_strided_slice %74 {offsets = [0, 96], sizes = [2, 32], strides = [1, 1]} : vector<2x128xf32> to vector<2x32xf32>
    %82 = math.tanh %81 : vector<2x32xf32>
    %83 = vector.extract_strided_slice %80 {offsets = [0, 0], sizes = [2, 32], strides = [1, 1]} : vector<2x96xf32> to vector<2x32xf32>
    %84 = vector.extract_strided_slice %80 {offsets = [0, 32], sizes = [2, 32], strides = [1, 1]} : vector<2x96xf32> to vector<2x32xf32>
    %85 = vector.extract_strided_slice %80 {offsets = [0, 64], sizes = [2, 32], strides = [1, 1]} : vector<2x96xf32> to vector<2x32xf32>
    %c0_65 = arith.constant 0 : index
    %c0_66 = arith.constant 0 : index
    %c0_67 = arith.constant 0 : index
    %86 = vector.load %arg2[%c0_65, %c0_66, %c0_67] : memref<4x2x32xf32, #tpu.memory_space<vmem>>, vector<1x2x32xf32>
    %87 = vector.shape_cast %86 : vector<1x2x32xf32> to vector<2x32xf32>
    %88 = arith.mulf %84, %87 : vector<2x32xf32>
    %89 = arith.mulf %83, %82 : vector<2x32xf32>
    %90 = arith.addf %88, %89 : vector<2x32xf32>
    %91 = math.tanh %90 : vector<2x32xf32>
    %92 = arith.mulf %85, %91 : vector<2x32xf32>
    %c0_68 = arith.constant 0 : index
    %c0_69 = arith.constant 0 : index
    %c0_70 = arith.constant 0 : index
    %93 = vector.load %arg10[%c0_68, %c0_69, %c0_70] : memref<3x32x128xf32, #tpu.memory_space<vmem>>, vector<1x32x128xf32>
    %94 = vector.shape_cast %93 : vector<1x32x128xf32> to vector<32x128xf32>
    %cst_71 = arith.constant dense<0.000000e+00> : vector<2x128xf32>
    %95 = tpu.matmul %92, %94, %cst_71 {dimension_numbers = #tpu.dot_dimension_numbers<[1], [0], [0], [1], [0, 0, 1, 1], [], []>} : vector<2x32xf32>, vector<32x128xf32>, vector<2x128xf32> -> vector<2x128xf32>
    %96 = arith.addf %95, %50 : vector<2x128xf32>
    %97 = vector.extract_strided_slice %96 {offsets = [0, 0], sizes = [2, 96], strides = [1, 1]} : vector<2x128xf32> to vector<2x96xf32>
    %98 = arith.negf %97 : vector<2x96xf32>
    %99 = math.exp %98 : vector<2x96xf32>
    %cst_72 = arith.constant 1.000000e+00 : f32
    %100 = vector.broadcast %cst_72 : f32 to vector<2x96xf32>
    %101 = arith.addf %100, %99 : vector<2x96xf32>
    %102 = arith.divf %100, %101 : vector<2x96xf32>
    %103 = vector.extract_strided_slice %96 {offsets = [0, 96], sizes = [2, 32], strides = [1, 1]} : vector<2x128xf32> to vector<2x32xf32>
    %104 = math.tanh %103 : vector<2x32xf32>
    %105 = vector.extract_strided_slice %102 {offsets = [0, 0], sizes = [2, 32], strides = [1, 1]} : vector<2x96xf32> to vector<2x32xf32>
    %106 = vector.extract_strided_slice %102 {offsets = [0, 32], sizes = [2, 32], strides = [1, 1]} : vector<2x96xf32> to vector<2x32xf32>
    %107 = vector.extract_strided_slice %102 {offsets = [0, 64], sizes = [2, 32], strides = [1, 1]} : vector<2x96xf32> to vector<2x32xf32>
    %c1_73 = arith.constant 1 : index
    %c0_74 = arith.constant 0 : index
    %c0_75 = arith.constant 0 : index
    %108 = vector.load %arg2[%c1_73, %c0_74, %c0_75] : memref<4x2x32xf32, #tpu.memory_space<vmem>>, vector<1x2x32xf32>
    %109 = vector.shape_cast %108 : vector<1x2x32xf32> to vector<2x32xf32>
    %110 = arith.mulf %106, %109 : vector<2x32xf32>
    %111 = arith.mulf %105, %104 : vector<2x32xf32>
    %112 = arith.addf %110, %111 : vector<2x32xf32>
    %113 = math.tanh %112 : vector<2x32xf32>
    %114 = arith.mulf %107, %113 : vector<2x32xf32>
    %c1_76 = arith.constant 1 : index
    %c0_77 = arith.constant 0 : index
    %c0_78 = arith.constant 0 : index
    %115 = vector.load %arg10[%c1_76, %c0_77, %c0_78] : memref<3x32x128xf32, #tpu.memory_space<vmem>>, vector<1x32x128xf32>
    %116 = vector.shape_cast %115 : vector<1x32x128xf32> to vector<32x128xf32>
    %cst_79 = arith.constant dense<0.000000e+00> : vector<2x128xf32>
    %117 = tpu.matmul %114, %116, %cst_79 {dimension_numbers = #tpu.dot_dimension_numbers<[1], [0], [0], [1], [0, 0, 1, 1], [], []>} : vector<2x32xf32>, vector<32x128xf32>, vector<2x128xf32> -> vector<2x128xf32>
    %118 = arith.addf %117, %59 : vector<2x128xf32>
    %119 = vector.extract_strided_slice %118 {offsets = [0, 0], sizes = [2, 96], strides = [1, 1]} : vector<2x128xf32> to vector<2x96xf32>
    %120 = arith.negf %119 : vector<2x96xf32>
    %121 = math.exp %120 : vector<2x96xf32>
    %cst_80 = arith.constant 1.000000e+00 : f32
    %122 = vector.broadcast %cst_80 : f32 to vector<2x96xf32>
    %123 = arith.addf %122, %121 : vector<2x96xf32>
    %124 = arith.divf %122, %123 : vector<2x96xf32>
    %125 = vector.extract_strided_slice %118 {offsets = [0, 96], sizes = [2, 32], strides = [1, 1]} : vector<2x128xf32> to vector<2x32xf32>
    %126 = math.tanh %125 : vector<2x32xf32>
    %127 = vector.extract_strided_slice %124 {offsets = [0, 0], sizes = [2, 32], strides = [1, 1]} : vector<2x96xf32> to vector<2x32xf32>
    %128 = vector.extract_strided_slice %124 {offsets = [0, 32], sizes = [2, 32], strides = [1, 1]} : vector<2x96xf32> to vector<2x32xf32>
    %129 = vector.extract_strided_slice %124 {offsets = [0, 64], sizes = [2, 32], strides = [1, 1]} : vector<2x96xf32> to vector<2x32xf32>
    %c2_81 = arith.constant 2 : index
    %c0_82 = arith.constant 0 : index
    %c0_83 = arith.constant 0 : index
    %130 = vector.load %arg2[%c2_81, %c0_82, %c0_83] : memref<4x2x32xf32, #tpu.memory_space<vmem>>, vector<1x2x32xf32>
    %131 = vector.shape_cast %130 : vector<1x2x32xf32> to vector<2x32xf32>
    %132 = arith.mulf %128, %131 : vector<2x32xf32>
    %133 = arith.mulf %127, %126 : vector<2x32xf32>
    %134 = arith.addf %132, %133 : vector<2x32xf32>
    %135 = math.tanh %134 : vector<2x32xf32>
    %136 = arith.mulf %129, %135 : vector<2x32xf32>
    %c2_84 = arith.constant 2 : index
    %c0_85 = arith.constant 0 : index
    %c0_86 = arith.constant 0 : index
    %137 = vector.load %arg10[%c2_84, %c0_85, %c0_86] : memref<3x32x128xf32, #tpu.memory_space<vmem>>, vector<1x32x128xf32>
    %138 = vector.shape_cast %137 : vector<1x32x128xf32> to vector<32x128xf32>
    %cst_87 = arith.constant dense<0.000000e+00> : vector<2x128xf32>
    %139 = tpu.matmul %136, %138, %cst_87 {dimension_numbers = #tpu.dot_dimension_numbers<[1], [0], [0], [1], [0, 0, 1, 1], [], []>} : vector<2x32xf32>, vector<32x128xf32>, vector<2x128xf32> -> vector<2x128xf32>
    %140 = arith.addf %139, %68 : vector<2x128xf32>
    %141 = vector.extract_strided_slice %140 {offsets = [0, 0], sizes = [2, 96], strides = [1, 1]} : vector<2x128xf32> to vector<2x96xf32>
    %142 = arith.negf %141 : vector<2x96xf32>
    %143 = math.exp %142 : vector<2x96xf32>
    %cst_88 = arith.constant 1.000000e+00 : f32
    %144 = vector.broadcast %cst_88 : f32 to vector<2x96xf32>
    %145 = arith.addf %144, %143 : vector<2x96xf32>
    %146 = arith.divf %144, %145 : vector<2x96xf32>
    %147 = vector.extract_strided_slice %140 {offsets = [0, 96], sizes = [2, 32], strides = [1, 1]} : vector<2x128xf32> to vector<2x32xf32>
    %148 = math.tanh %147 : vector<2x32xf32>
    %149 = vector.extract_strided_slice %146 {offsets = [0, 0], sizes = [2, 32], strides = [1, 1]} : vector<2x96xf32> to vector<2x32xf32>
    %150 = vector.extract_strided_slice %146 {offsets = [0, 32], sizes = [2, 32], strides = [1, 1]} : vector<2x96xf32> to vector<2x32xf32>
    %151 = vector.extract_strided_slice %146 {offsets = [0, 64], sizes = [2, 32], strides = [1, 1]} : vector<2x96xf32> to vector<2x32xf32>
    %c3_89 = arith.constant 3 : index
    %c0_90 = arith.constant 0 : index
    %c0_91 = arith.constant 0 : index
    %152 = vector.load %arg2[%c3_89, %c0_90, %c0_91] : memref<4x2x32xf32, #tpu.memory_space<vmem>>, vector<1x2x32xf32>
    %153 = vector.shape_cast %152 : vector<1x2x32xf32> to vector<2x32xf32>
    %154 = arith.mulf %150, %153 : vector<2x32xf32>
    %155 = arith.mulf %149, %148 : vector<2x32xf32>
    %156 = arith.addf %154, %155 : vector<2x32xf32>
    %157 = math.tanh %156 : vector<2x32xf32>
    %158 = arith.mulf %151, %157 : vector<2x32xf32>
    %159 = tpu.concatenate %92, %114, %136, %158 in 1 : vector<2x32xf32>, vector<2x32xf32>, vector<2x32xf32>, vector<2x32xf32> -> vector<2x128xf32>
    %c0_92 = arith.constant 0 : index
    %c0_93 = arith.constant 0 : index
    %160 = vector.load %arg16[%c0_92, %c0_93] : memref<2x128xf32, #tpu.memory_space<vmem>>, vector<2x128xf32>
    tpu.vector_store %arg16[%c0_92, %c0_93], %159 {strides = array<i32>} : memref<2x128xf32, #tpu.memory_space<vmem>>, vector<2x128xf32>,
    %161 = tpu.concatenate %90, %112, %134, %156 in 1 : vector<2x32xf32>, vector<2x32xf32>, vector<2x32xf32>, vector<2x32xf32> -> vector<2x128xf32>
    %c0_94 = arith.constant 0 : index
    %c0_95 = arith.constant 0 : index
    %162 = vector.load %arg17[%c0_94, %c0_95] : memref<2x128xf32, #tpu.memory_space<vmem>>, vector<2x128xf32>
    tpu.vector_store %arg17[%c0_94, %c0_95], %161 {strides = array<i32>} : memref<2x128xf32, #tpu.memory_space<vmem>>, vector<2x128xf32>,
    %c0_96 = arith.constant 0 : index
    %c0_97 = arith.constant 0 : index
    %163 = vector.load %arg13[%c0_96, %c0_97] : memref<32x16xf32, #tpu.memory_space<vmem>>, vector<32x16xf32>
    %cst_98 = arith.constant dense<0.000000e+00> : vector<2x16xf32>
    %164 = tpu.matmul %158, %163, %cst_98 {dimension_numbers = #tpu.dot_dimension_numbers<[1], [0], [0], [1], [0, 0, 1, 1], [], []>} : vector<2x32xf32>, vector<32x16xf32>, vector<2x16xf32> -> vector<2x16xf32>
    %c0_99 = arith.constant 0 : index
    %c0_100 = arith.constant 0 : index
    %165 = vector.load %arg14[%c0_99, %c0_100] : memref<1x16xf32, #tpu.memory_space<vmem>>, vector<1x16xf32>
    %166 = vector.broadcast %165 : vector<1x16xf32> to vector<2x16xf32>
    %167 = arith.addf %164, %166 : vector<2x16xf32>
    %c0_101 = arith.constant 0 : index
    %c0_102 = arith.constant 0 : index
    %168 = vector.load %arg15[%c0_101, %c0_102] : memref<2x16xf32, #tpu.memory_space<vmem>>, vector<2x16xf32>
    tpu.vector_store %arg15[%c0_101, %c0_102], %167 {strides = array<i32>} : memref<2x16xf32, #tpu.memory_space<vmem>>, vector<2x16xf32>,
    return
  }
}

</mosaic_0001>

<llo_original>
// kernel: tpu_custom_call.1
$region0: #{tpu_custom_call.1}
  #allocation0 [shape = 'u32[]', space=smem, size = 0x4, offset = 0x4, fixed_abs, tag = 'smem constant byte address 0x4 - core index']
  #allocation1 [shape = 'u32[144,128]{1,0:T(1,128)}', space=vmem, size = 0x12000, scoped, tag = 'internal scratch']
  %s0 = inlined_call_operand.hbm [shape: f32[2,8,32], index: 0, kind: input, shape index: {}]
  %s1 = inlined_call_operand.hbm [shape: f32[4,2,32], index: 1, kind: input, shape index: {}]
  %s2 = inlined_call_operand.hbm [shape: f32[4,2,32], index: 2, kind: input, shape index: {}]
  %s3 = inlined_call_operand.hbm [shape: f32[2,32], index: 3, kind: input, shape index: {}]
  %s4 = inlined_call_operand.vmem [shape: f32[32,32], index: 4, kind: input, shape index: {}]
  %s5 = inlined_call_operand.vmem [shape: f32[32,32], index: 5, kind: input, shape index: {}]
  %s6 = inlined_call_operand.vmem [shape: f32[1,32], index: 6, kind: input, shape index: {}]
  %s7 = inlined_call_operand.hbm [shape: f32[1,32], index: 7, kind: input, shape index: {}]
  %s8 = inlined_call_operand.hbm [shape: f32[32,128], index: 8, kind: input, shape index: {}]
  %s9 = inlined_call_operand.hbm [shape: f32[32,128], index: 9, kind: input, shape index: {}]
  %s10 = inlined_call_operand.hbm [shape: f32[3,32,128], index: 10, kind: input, shape index: {}]
  %s11 = inlined_call_operand.hbm [shape: f32[4,32,128], index: 11, kind: input, shape index: {}]
  %s12 = inlined_call_operand.vmem [shape: f32[4,1,128], index: 12, kind: input, shape index: {}]
  %s13 = inlined_call_operand.vmem [shape: f32[32,16], index: 13, kind: input, shape index: {}]
  %s14 = inlined_call_operand.vmem [shape: f32[1,16], index: 14, kind: input, shape index: {}]
  %s15 = inlined_call_operand.hbm [shape: f32[2,16], index: 15, kind: output, shape index: {0}]
  %s16 = inlined_call_operand.hbm [shape: f32[2,128], index: 16, kind: output, shape index: {1}]
  %s17 = inlined_call_operand.hbm [shape: f32[2,128], index: 17, kind: output, shape index: {2}]
  %18 = xla_tuple %s15, %s16, %s17
  %s19 = sld [smem:[#allocation0]]
  $region122: #{tpu_custom_call.1} parent=0
    _
  %s21 = ssub.s32 1, %s19
  %s22 = scalar_select 0, %s21, %s19
  $region1: #{tpu_custom_call.1} parent=0
    #allocation2 [shape = 'u8[8192]{0}', space=vmem, size = 0x2000, scoped, tag = 'input window, operand 0, single buffered']
    #allocation3 [shape = 's32[1]{0}', space=sflag, size = 0x4, scoped, tag = 'scoped memory for tpu_custom_call.1']
    #allocation4 [shape = 's32[1]{0}', space=sflag, size = 0x4, scoped, tag = 'scoped memory for tpu_custom_call.1']
    #allocation5 [shape = 'u8[4096]{0}', space=vmem, size = 0x1000, scoped, tag = 'input window, operand 1, single buffered']
    #allocation6 [shape = 's32[1]{0}', space=sflag, size = 0x4, scoped, tag = 'scoped memory for tpu_custom_call.1']
    #allocation7 [shape = 'u8[4096]{0}', space=vmem, size = 0x1000, scoped, tag = 'input window, operand 2, single buffered']
    #allocation8 [shape = 'u8[1024]{0}', space=vmem, size = 0x400, scoped, tag = 'input window, operand 3, single buffered']
    #allocation9 [shape = 's32[1]{0}', space=sflag, size = 0x4, scoped, tag = 'scoped memory for tpu_custom_call.1']
    #allocation10 [shape = 'u8[512]{0}', space=vmem, size = 0x400, scoped, tag = 'input window, operand 7, single buffered']
    #allocation11 [shape = 'u8[16384]{0}', space=vmem, size = 0x4000, scoped, tag = 'input window, operand 8, single buffered']
    #allocation12 [shape = 's32[1]{0}', space=sflag, size = 0x4, scoped, tag = 'scoped memory for tpu_custom_call.1']
    #allocation13 [shape = 'u8[16384]{0}', space=vmem, size = 0x4000, scoped, tag = 'input window, operand 9, single buffered']
    #allocation14 [shape = 'u8[49152]{0}', space=vmem, size = 0xc000, scoped, tag = 'input window, operand 10, single buffered']
    #allocation15 [shape = 's32[1]{0}', space=sflag, size = 0x4, scoped, tag = 'scoped memory for tpu_custom_call.1']
    #allocation16 [shape = 'u8[65536]{0}', space=vmem, size = 0x10000, scoped, tag = 'input window, operand 11, single buffered']
    #allocation17 [shape = 'u8[1024]{0}', space=vmem, size = 0x400, scoped, tag = 'output window, operand 0, single buffered']
    #allocation18 [shape = 'u8[1024]{0}', space=vmem, size = 0x400, scoped, tag = 'output window, operand 1, single buffered']
    #allocation19 [shape = 's32[1]{0}', space=sflag, size = 0x4, scoped, tag = 'scoped memory for tpu_custom_call.1']
    #allocation20 [shape = 'u8[1024]{0}', space=vmem, size = 0x400, scoped, tag = 'output window, operand 2, single buffered']
    %23 = vsyncpa [#allocation3], 0
    %24 = vsyncpa [#allocation6], 0
    %25 = vsyncpa [#allocation9], 0
    %26 = vsyncpa [#allocation12], 0
    %27 = vsyncpa [#allocation15], 0
    %28 = vsyncpa [#allocation4], 0
    %29 = vsyncpa [#allocation19], 0
    // Predicated region
    $region2: #{tpu_custom_call.1} parent=1 // pred_check
      _
    $region3: #{tpu_custom_call.1} parent=1 // pred_check_branch
      %31 = sbr.rel (0) target = $region5
    $region4: #{tpu_custom_call.1} parent=1 // pred_region
      %s33 = ssub.s32 256, 256
      %34 = vsyncadd [#allocation3], %s33
      %s35 = sshll.u32 [#allocation2], 4
      %s36 = int_to_ptr.vmem [resolvable:$true] %s35
      %41 = dma.hbm_to_vmem [thread:$0]  %s0, 256, %s36, [#allocation3], 128, 128, 8
    $region5: #{tpu_custom_call.1} parent=1 // pred_fallthru
      _
    // Predicated region
    $region6: #{tpu_custom_call.1} parent=1 // pred_check
      _
    $region7: #{tpu_custom_call.1} parent=1 // pred_check_branch
      %43 = sbr.rel (0) target = $region9
    $region8: #{tpu_custom_call.1} parent=1 // pred_region
      %s45 = ssub.s32 128, 128
      %46 = vsyncadd [#allocation6], %s45
      %s47 = sshll.u32 [#allocation5], 4
      %s48 = int_to_ptr.vmem [resolvable:$true] %s47
      %53 = dma.hbm_to_vmem [thread:$0]  %s1, 128, %s48, [#allocation6], 32, 32, 2
    $region9: #{tpu_custom_call.1} parent=1 // pred_fallthru
      _
    // Predicated region
    $region10: #{tpu_custom_call.1} parent=1 // pred_check
      _
    $region11: #{tpu_custom_call.1} parent=1 // pred_check_branch
      %55 = sbr.rel (0) target = $region13
    $region12: #{tpu_custom_call.1} parent=1 // pred_region
      %s57 = ssub.s32 128, 128
      %58 = vsyncadd [#allocation6], %s57
      %s59 = sshll.u32 [#allocation7], 4
      %s60 = int_to_ptr.vmem [resolvable:$true] %s59
      %65 = dma.hbm_to_vmem [thread:$0]  %s2, 128, %s60, [#allocation6], 32, 32, 2
    $region13: #{tpu_custom_call.1} parent=1 // pred_fallthru
      _
    // Predicated region
    $region14: #{tpu_custom_call.1} parent=1 // pred_check
      _
    $region15: #{tpu_custom_call.1} parent=1 // pred_check_branch
      %67 = sbr.rel (0) target = $region17
    $region16: #{tpu_custom_call.1} parent=1 // pred_region
      %s69 = ssub.s32 32, 32
      %70 = vsyncadd [#allocation9], %s69
      %s72 = sshll.u32 [#allocation8], 4
      %s73 = int_to_ptr.vmem [resolvable:$true] %s72
      %75 = dma.hbm_to_vmem [thread:$0]  %s3, 32, %s73, [#allocation9]
    $region17: #{tpu_custom_call.1} parent=1 // pred_fallthru
      _
    // Predicated region
    $region18: #{tpu_custom_call.1} parent=1 // pred_check
      _
    $region19: #{tpu_custom_call.1} parent=1 // pred_check_branch
      %77 = sbr.rel (0) target = $region21
    $region20: #{tpu_custom_call.1} parent=1 // pred_region
      _
    $region21: #{tpu_custom_call.1} parent=1 // pred_fallthru
      _
    // Predicated region
    $region22: #{tpu_custom_call.1} parent=1 // pred_check
      _
    $region23: #{tpu_custom_call.1} parent=1 // pred_check_branch
      %79 = sbr.rel (0) target = $region25
    $region24: #{tpu_custom_call.1} parent=1 // pred_region
      _
    $region25: #{tpu_custom_call.1} parent=1 // pred_fallthru
      _
    // Predicated region
    $region26: #{tpu_custom_call.1} parent=1 // pred_check
      _
    $region27: #{tpu_custom_call.1} parent=1 // pred_check_branch
      %81 = sbr.rel (0) target = $region29
    $region28: #{tpu_custom_call.1} parent=1 // pred_region
      _
    $region29: #{tpu_custom_call.1} parent=1 // pred_fallthru
      _
    // Predicated region
    $region30: #{tpu_custom_call.1} parent=1 // pred_check
      _
    $region31: #{tpu_custom_call.1} parent=1 // pred_check_branch
      %83 = sbr.rel (0) target = $region33
    $region32: #{tpu_custom_call.1} parent=1 // pred_region
      %s85 = ssub.s32 16, 16
      %86 = vsyncadd [#allocation9], %s85
      %s88 = sshll.u32 [#allocation10], 4
      %s89 = int_to_ptr.vmem [resolvable:$true] %s88
      %91 = dma.hbm_to_vmem [thread:$0]  %s7, 16, %s89, [#allocation9]
    $region33: #{tpu_custom_call.1} parent=1 // pred_fallthru
      _
    // Predicated region
    $region34: #{tpu_custom_call.1} parent=1 // pred_check
      _
    $region35: #{tpu_custom_call.1} parent=1 // pred_check_branch
      %93 = sbr.rel (0) target = $region37
    $region36: #{tpu_custom_call.1} parent=1 // pred_region
      %s95 = ssub.s32 512, 512
      %96 = vsyncadd [#allocation12], %s95
      %s97 = sshll.u32 [#allocation11], 4
      %s98 = int_to_ptr.vmem [resolvable:$true] %s97
      %103 = dma.hbm_to_vmem [thread:$0]  %s8, 512, %s98, [#allocation12], 128, 128, 8
    $region37: #{tpu_custom_call.1} parent=1 // pred_fallthru
      _
    // Predicated region
    $region38: #{tpu_custom_call.1} parent=1 // pred_check
      _
    $region39: #{tpu_custom_call.1} parent=1 // pred_check_branch
      %105 = sbr.rel (0) target = $region41
    $region40: #{tpu_custom_call.1} parent=1 // pred_region
      %s107 = ssub.s32 512, 512
      %108 = vsyncadd [#allocation12], %s107
      %s109 = sshll.u32 [#allocation13], 4
      %s110 = int_to_ptr.vmem [resolvable:$true] %s109
      %115 = dma.hbm_to_vmem [thread:$0]  %s9, 512, %s110, [#allocation12], 128, 128, 8
    $region41: #{tpu_custom_call.1} parent=1 // pred_fallthru
      _
    // Predicated region
    $region42: #{tpu_custom_call.1} parent=1 // pred_check
      _
    $region43: #{tpu_custom_call.1} parent=1 // pred_check_branch
      %117 = sbr.rel (0) target = $region45
    $region44: #{tpu_custom_call.1} parent=1 // pred_region
      %s119 = ssub.s32 1536, 1536
      %120 = vsyncadd [#allocation15], %s119
      %s121 = sshll.u32 [#allocation14], 4
      %s122 = int_to_ptr.vmem [resolvable:$true] %s121
      %127 = dma.hbm_to_vmem [thread:$0]  %s10, 1536, %s122, [#allocation15], 128, 128, 8
    $region45: #{tpu_custom_call.1} parent=1 // pred_fallthru
      _
    // Predicated region
    $region46: #{tpu_custom_call.1} parent=1 // pred_check
      _
    $region47: #{tpu_custom_call.1} parent=1 // pred_check_branch
      %129 = sbr.rel (0) target = $region49
    $region48: #{tpu_custom_call.1} parent=1 // pred_region
      %s131 = ssub.s32 2048, 2048
      %132 = vsyncadd [#allocation15], %s131
      %s133 = sshll.u32 [#allocation16], 4
      %s134 = int_to_ptr.vmem [resolvable:$true] %s133
      %139 = dma.hbm_to_vmem [thread:$0]  %s11, 2048, %s134, [#allocation15], 128, 128, 8
    $region49: #{tpu_custom_call.1} parent=1 // pred_fallthru
      _
    // Predicated region
    $region50: #{tpu_custom_call.1} parent=1 // pred_check
      _
    $region51: #{tpu_custom_call.1} parent=1 // pred_check_branch
      %141 = sbr.rel (0) target = $region53
    $region52: #{tpu_custom_call.1} parent=1 // pred_region
      _
    $region53: #{tpu_custom_call.1} parent=1 // pred_fallthru
      _
    // Predicated region
    $region54: #{tpu_custom_call.1} parent=1 // pred_check
      _
    $region55: #{tpu_custom_call.1} parent=1 // pred_check_branch
      %143 = sbr.rel (0) target = $region57
    $region56: #{tpu_custom_call.1} parent=1 // pred_region
      _
    $region57: #{tpu_custom_call.1} parent=1 // pred_fallthru
      _
    // Predicated region
    $region58: #{tpu_custom_call.1} parent=1 // pred_check
      _
    $region59: #{tpu_custom_call.1} parent=1 // pred_check_branch
      %145 = sbr.rel (0) target = $region61
    $region60: #{tpu_custom_call.1} parent=1 // pred_region
      _
    $region61: #{tpu_custom_call.1} parent=1 // pred_fallthru
      _
    // Predicated region
    $region62: #{tpu_custom_call.1} parent=1 // pred_check
      _
    $region63: #{tpu_custom_call.1} parent=1 // pred_check_branch
      %147 = sbr.rel (0) target = $region65
    $region64: #{tpu_custom_call.1} parent=1 // pred_region
      %148 = dma.done [#allocation3], 256
    $region65: #{tpu_custom_call.1} parent=1 // pred_fallthru
      _
    // Predicated region
    $region66: #{tpu_custom_call.1} parent=1 // pred_check
      _
    $region67: #{tpu_custom_call.1} parent=1 // pred_check_branch
      %150 = sbr.rel (0) target = $region69
    $region68: #{tpu_custom_call.1} parent=1 // pred_region
      %151 = dma.done [#allocation6], 128
    $region69: #{tpu_custom_call.1} parent=1 // pred_fallthru
      _
    // Predicated region
    $region70: #{tpu_custom_call.1} parent=1 // pred_check
      _
    $region71: #{tpu_custom_call.1} parent=1 // pred_check_branch
      %153 = sbr.rel (0) target = $region73
    $region72: #{tpu_custom_call.1} parent=1 // pred_region
      %154 = dma.done [#allocation6], 128
    $region73: #{tpu_custom_call.1} parent=1 // pred_fallthru
      _
    // Predicated region
    $region74: #{tpu_custom_call.1} parent=1 // pred_check
      _
    $region75: #{tpu_custom_call.1} parent=1 // pred_check_branch
      %156 = sbr.rel (0) target = $region77
    $region76: #{tpu_custom_call.1} parent=1 // pred_region
      %157 = dma.done [#allocation9], 32
    $region77: #{tpu_custom_call.1} parent=1 // pred_fallthru
      _
    // Predicated region
    $region78: #{tpu_custom_call.1} parent=1 // pred_check
      _
    $region79: #{tpu_custom_call.1} parent=1 // pred_check_branch
      %159 = sbr.rel (0) target = $region81
    $region80: #{tpu_custom_call.1} parent=1 // pred_region
      %160 = dma.done [#allocation9], 16
    $region81: #{tpu_custom_call.1} parent=1 // pred_fallthru
      _
    // Predicated region
    $region82: #{tpu_custom_call.1} parent=1 // pred_check
      _
    $region83: #{tpu_custom_call.1} parent=1 // pred_check_branch
      %162 = sbr.rel (0) target = $region85
    $region84: #{tpu_custom_call.1} parent=1 // pred_region
      %163 = dma.done [#allocation12], 512
    $region85: #{tpu_custom_call.1} parent=1 // pred_fallthru
      _
    // Predicated region
    $region86: #{tpu_custom_call.1} parent=1 // pred_check
      _
    $region87: #{tpu_custom_call.1} parent=1 // pred_check_branch
      %165 = sbr.rel (0) target = $region89
    $region88: #{tpu_custom_call.1} parent=1 // pred_region
      %166 = dma.done [#allocation12], 512
    $region89: #{tpu_custom_call.1} parent=1 // pred_fallthru
      _
    // Predicated region
    $region90: #{tpu_custom_call.1} parent=1 // pred_check
      _
    $region91: #{tpu_custom_call.1} parent=1 // pred_check_branch
      %168 = sbr.rel (0) target = $region93
    $region92: #{tpu_custom_call.1} parent=1 // pred_region
      %169 = dma.done [#allocation15], 1536
    $region93: #{tpu_custom_call.1} parent=1 // pred_fallthru
      _
    // Predicated region
    $region94: #{tpu_custom_call.1} parent=1 // pred_check
      _
    $region95: #{tpu_custom_call.1} parent=1 // pred_check_branch
      %171 = sbr.rel (0) target = $region97
    $region96: #{tpu_custom_call.1} parent=1 // pred_region
      %172 = dma.done [#allocation15], 2048
    $region97: #{tpu_custom_call.1} parent=1 // pred_fallthru
      _
    %v173 = vld [vmem:[#allocation2] sm:$0xff]
    %v174 = vld [vmem:[#allocation2 + $0x8] sm:$0xff]
    %v175 = vld [vmem:[#allocation5] sm:$0x3]
    %v176 = vld [vmem:[#allocation10] sm:$0x1]
    %v177 = vld [vmem:[%s4] sm:$0xff]
    %v178 = vld [vmem:[%s4 + $0x8] sm:$0xff]
    %v179 = vld [vmem:[%s4 + $0x10] sm:$0xff]
    %v180 = vld [vmem:[%s4 + $0x18] sm:$0xff]
    %v181 = vld [vmem:[%s6] sm:$0x1]
    %v183 = vlaneseq
    %v184 = vshrl.u32 %v183, 7
    %v185 = vsub.s32 0, %v184
    %v186 = vrot.slane %v181, %v185
    %vm188 = vcmask 261120
    %v190 = vsel %vm188, %v175, 0
    %192 = vmatprep.subr.mxu0 0.0
    %193 = vmatpush1.msra.mxu0 %v177
    %194 = vmatprep.subr.mxu0 0.0
    %195 = vmatpush1.msra.mxu0 %v178
    %196 = vmatprep.subr.mxu0 0.0
    %197 = vmatpush1.msra.mxu0 %v179
    %198 = vmatprep.subr.mxu0 0.0
    %199 = vmatpush1.msra.mxu0 %v180
    %200 = vmatprep.subr.mxu0 0.0
    %201 = vmatpush1.msra.mxu0 0.0
    %202 = vmatprep.subr.mxu0 0.0
    %203 = vmatpush1.msra.mxu0 0.0
    %204 = vmatprep.subr.mxu0 0.0
    %205 = vmatpush1.msra.mxu0 0.0
    %206 = vmatprep.subr.mxu0 0.0
    %207 = vmatpush1.msra.mxu0 0.0
    %208 = vmatprep.subr.mxu0 0.0
    %209 = vmatpush1.msra.mxu0 0.0
    %210 = vmatprep.subr.mxu0 0.0
    %211 = vmatpush1.msra.mxu0 0.0
    %212 = vmatprep.subr.mxu0 0.0
    %213 = vmatpush1.msra.mxu0 0.0
    %214 = vmatprep.subr.mxu0 0.0
    %215 = vmatpush1.msra.mxu0 0.0
    %216 = vmatprep.subr.mxu0 0.0
    %217 = vmatpush1.msra.mxu0 0.0
    %218 = vmatprep.subr.mxu0 0.0
    %219 = vmatpush1.msra.mxu0 0.0
    %220 = vmatprep.subr.mxu0 0.0
    %221 = vmatpush1.msra.mxu0 0.0
    %222 = vmatprep.subr.mxu0 0.0
    %223 = vmatpush1.msra.mxu0 0.0
    %224 = vmatprep.subr.mxu0 0.0
    %225 = vmatpush1.msra.mxu0 0.0
    %226 = vmatprep.subr.mxu0 0.0
    %227 = vmatpush1.msra.mxu0 0.0
    %228 = vmatprep.subr.mxu0 0.0
    %229 = vmatpush1.msra.mxu0 0.0
    %230 = vmatprep.subr.mxu0 0.0
    %231 = vmatpush1.msra.mxu0 0.0
    %232 = vmatprep.subr.mxu0 0.0
    %233 = vmatpush1.msra.mxu0 0.0
    %234 = vmatprep.subr.mxu0 0.0
    %235 = vmatpush1.msra.mxu0 0.0
    %236 = vmatprep.subr.mxu0 0.0
    %237 = vmatpush1.msra.mxu0 0.0
    %238 = vmatprep.subr.mxu0 0.0
    %239 = vmatpush1.msra.mxu0 0.0
    %240 = vmatprep.subr.mxu0 0.0
    %241 = vmatpush1.msra.mxu0 0.0
    %242 = vmatprep.subr.mxu0 0.0
    %243 = vmatpush1.msra.mxu0 0.0
    %244 = vmatprep.subr.mxu0 0.0
    %245 = vmatpush1.msra.mxu0 0.0
    %246 = vmatprep.subr.mxu0 0.0
    %247 = vmatpush1.msra.mxu0 0.0
    %248 = vmatprep.subr.mxu0 0.0
    %249 = vmatpush1.msra.mxu0 0.0
    %250 = vmatprep.subr.mxu0 0.0
    %251 = vmatpush1.msra.mxu0 0.0
    %252 = vmatprep.subr.mxu0 0.0
    %253 = vmatpush1.msra.mxu0 0.0
    %254 = vmatprep.subr.mxu0 0.0
    %255 = vmatpush1.msra.mxu0 0.0
    %256 = vmatprep.mubr.f32.mxu0 0.0
    %257 = vmatmul.mubr.f32.gmra.mrb[0].mxu0 %v190
    %v258 = vpop.f32.mrb[0].mxu0
    %v259 = vadd.f32 %v186, %v258
    %v260 = vpop.f32.mrb[0].mxu0
    %261 = vdwg.mxu0
    %v263 = vlaneseq
    %v264 = vshrl.u32 %v263, 7
    %v265 = vsub.s32 0, %v264
    %v266 = vrot.slane %v176, %v265
    %v268 = vmul.f32 %v259, %v266
    %vm269 = vcmask 254976
    %v270 = vsel %vm269, %v268, 0.0
    %271 = vadd.xlane.f32.xlu0 %v270
    %v272 = vpop.xlane.xlu0 %271
    %v273 = vld [vmem:[%s5] sm:$0xff]
    %v274 = vld [vmem:[%s5 + $0x8] sm:$0xff]
    %v275 = vld [vmem:[%s5 + $0x10] sm:$0xff]
    %v276 = vld [vmem:[%s5 + $0x18] sm:$0xff]
    %v278 = vsel %vm188, %v173, 0
    %v281 = vsel %vm188, %v174, 0
    %283 = vmatprep.subr.mxu0 0.0
    %284 = vmatpush1.msra.mxu0 %v273
    %285 = vmatprep.subr.mxu0 0.0
    %286 = vmatpush1.msra.mxu0 %v274
    %287 = vmatprep.subr.mxu0 0.0
    %288 = vmatpush1.msra.mxu0 %v275
    %289 = vmatprep.subr.mxu0 0.0
    %290 = vmatpush1.msra.mxu0 %v276
    %291 = vmatprep.subr.mxu0 0.0
    %292 = vmatpush1.msra.mxu0 0.0
    %293 = vmatprep.subr.mxu0 0.0
    %294 = vmatpush1.msra.mxu0 0.0
    %295 = vmatprep.subr.mxu0 0.0
    %296 = vmatpush1.msra.mxu0 0.0
    %297 = vmatprep.subr.mxu0 0.0
    %298 = vmatpush1.msra.mxu0 0.0
    %299 = vmatprep.subr.mxu0 0.0
    %300 = vmatpush1.msra.mxu0 0.0
    %301 = vmatprep.subr.mxu0 0.0
    %302 = vmatpush1.msra.mxu0 0.0
    %303 = vmatprep.subr.mxu0 0.0
    %304 = vmatpush1.msra.mxu0 0.0
    %305 = vmatprep.subr.mxu0 0.0
    %306 = vmatpush1.msra.mxu0 0.0
    %307 = vmatprep.subr.mxu0 0.0
    %308 = vmatpush1.msra.mxu0 0.0
    %309 = vmatprep.subr.mxu0 0.0
    %310 = vmatpush1.msra.mxu0 0.0
    %311 = vmatprep.subr.mxu0 0.0
    %312 = vmatpush1.msra.mxu0 0.0
    %313 = vmatprep.subr.mxu0 0.0
    %314 = vmatpush1.msra.mxu0 0.0
    %315 = vmatprep.subr.mxu0 0.0
    %316 = vmatpush1.msra.mxu0 0.0
    %317 = vmatprep.subr.mxu0 0.0
    %318 = vmatpush1.msra.mxu0 0.0
    %319 = vmatprep.subr.mxu0 0.0
    %320 = vmatpush1.msra.mxu0 0.0
    %321 = vmatprep.subr.mxu0 0.0
    %322 = vmatpush1.msra.mxu0 0.0
    %323 = vmatprep.subr.mxu0 0.0
    %324 = vmatpush1.msra.mxu0 0.0
    %325 = vmatprep.subr.mxu0 0.0
    %326 = vmatpush1.msra.mxu0 0.0
    %327 = vmatprep.subr.mxu0 0.0
    %328 = vmatpush1.msra.mxu0 0.0
    %329 = vmatprep.subr.mxu0 0.0
    %330 = vmatpush1.msra.mxu0 0.0
    %331 = vmatprep.subr.mxu0 0.0
    %332 = vmatpush1.msra.mxu0 0.0
    %333 = vmatprep.subr.mxu0 0.0
    %334 = vmatpush1.msra.mxu0 0.0
    %335 = vmatprep.subr.mxu0 0.0
    %336 = vmatpush1.msra.mxu0 0.0
    %337 = vmatprep.subr.mxu0 0.0
    %338 = vmatpush1.msra.mxu0 0.0
    %339 = vmatprep.subr.mxu0 0.0
    %340 = vmatpush1.msra.mxu0 0.0
    %341 = vmatprep.subr.mxu0 0.0
    %342 = vmatpush1.msra.mxu0 0.0
    %343 = vmatprep.subr.mxu0 0.0
    %344 = vmatpush1.msra.mxu0 0.0
    %345 = vmatprep.subr.mxu0 0.0
    %346 = vmatpush1.msra.mxu0 0.0
    %347 = vmatprep.mubr.f32.mxu0 0.0
    %348 = vmatmul.mubr.f32.gmra.mrb[0].mxu0 %v278
    %v349 = vpop.f32.mrb[0].mxu0
    %v350 = vadd.f32 0.0, %v349
    %v351 = vpop.f32.mrb[0].mxu0
    %352 = vmatprep.mubr.f32.mxu0 0.0
    %353 = vmatmul.mubr.f32.gmra.mrb[0].mxu0 %v281
    %v354 = vpop.f32.mrb[0].mxu0
    %v355 = vadd.f32 0.0, %v354
    %v356 = vpop.f32.mrb[0].mxu0
    %357 = vdwg.mxu0
    %v358 = vmul.f32 %v350, %v266
    %v359 = vmul.f32 %v355, %v266
    %v360 = vsel %vm188, %v358, 0.0
    %361 = vadd.xlane.f32.xlu0 %v360
    %v362 = vpop.xlane.xlu0 %361
    %v363 = vsel %vm188, %v359, 0.0
    %364 = vadd.xlane.f32.xlu0 %v363
    %v365 = vpop.xlane.xlu0 %364
    %v367 = vlaneseq
    %v368 = vshrl.u32 %v367, 7
    %v369 = vsub.s32 0, %v368
    %v370 = vrot.slane %v272, %v369
    %v371 = vlaneseq
    %v372 = vshrl.u32 %v371, 7
    %v373 = vsub.s32 1, %v372
    %v374 = vrot.slane %v272, %v373
    %v377 = vadd.f32 %v362, %v370
    %v378 = vadd.f32 %v365, %v374
    %381 = vset.pattern.permute.xlu0 0
    %382 = vperm.xlu0 %381, %v377
    %v383 = vpop.permute.xlu0 %382
    %384 = vset.pattern.permute.xlu0 0
    %385 = vperm.xlu0 %384, %v378
    %v386 = vpop.permute.xlu0 %385
    %v387 = vlaneseq
    %v388 = vand.u32 %v387, 127
    %v389 = vlaneseq
    %v390 = vshrl.u32 %v389, 7
    %v391 = vsub.s32 %v388, %v390
    %v392 = vrot.slane %v383, %v391
    %v393 = vlaneseq
    %v394 = vshrl.u32 %v393, 7
    %v395 = vsub.s32 %v388, %v394
    %v396 = vrot.slane %v386, %v395
    %vm397 = vcmask 1041409
    %v398 = vsel %vm397, %v396, %v392
    %vm400 = vcmask 58368
    %v401 = vsel %vm400, %v398, -inf
    %402 = vmax.xlane.f32.xlu0 %v401
    %v403 = vpop.xlane.xlu0 %402
    %v405 = vlaneseq
    %v406 = vshrl.u32 %v405, 7
    %v407 = vsub.s32 0, %v406
    %v408 = vrot.slane %v403, %v407
    %v409 = vlaneseq
    %v410 = vshrl.u32 %v409, 7
    %v411 = vsub.s32 1, %v410
    %v412 = vrot.slane %v403, %v411
    %v415 = vsub.f32 %v377, %v408
    %v416 = vsub.f32 %v378, %v412
    %v417 = vmul.f32 %v415, 1.442695
    %v418 = vpow.pop %v417
    %v419 = vmul.f32 %v416, 1.442695
    %v420 = vpow.pop %v419
    %423 = vset.pattern.permute.xlu0 0
    %424 = vperm.xlu0 %423, %v418
    %v425 = vpop.permute.xlu0 %424
    %426 = vset.pattern.permute.xlu0 0
    %427 = vperm.xlu0 %426, %v420
    %v428 = vpop.permute.xlu0 %427
    %v429 = vlaneseq
    %v430 = vshrl.u32 %v429, 7
    %v431 = vsub.s32 %v388, %v430
    %v432 = vrot.slane %v425, %v431
    %v433 = vlaneseq
    %v434 = vshrl.u32 %v433, 7
    %v435 = vsub.s32 %v388, %v434
    %v436 = vrot.slane %v428, %v435
    %v437 = vsel %vm397, %v436, %v432
    %v439 = vsel %vm400, %v437, 0.0
    %440 = vadd.xlane.f32.xlu0 %v439
    %v441 = vpop.xlane.xlu0 %440
    %v443 = vlaneseq
    %v444 = vshrl.u32 %v443, 7
    %v445 = vsub.s32 0, %v444
    %v446 = vrot.slane %v441, %v445
    %v447 = vlaneseq
    %v448 = vshrl.u32 %v447, 7
    %v449 = vsub.s32 1, %v448
    %v450 = vrot.slane %v441, %v449
    %v453 = vrcp.pop %v446
    %v454 = vmul.f32 %v418, %v453
    %v455 = vrcp.pop %v450
    %v456 = vmul.f32 %v420, %v455
    %458 = vset.pattern.permute.xlu0 0
    %459 = vperm.xlu0 %458, %v454
    %v460 = vpop.permute.xlu0 %459
    %463 = vset.pattern.permute.xlu0 0
    %464 = vperm.xlu0 %463, %v456
    %v465 = vpop.permute.xlu0 %464
    %v467 = vmul.f32 %v460, %v173
    %v468 = vmul.f32 %v465, %v174
    %v469 = vsel %vm188, %v467, 0.0
    %v470 = vrot.slane %v469, 4
    %v471 = vadd.f32 %v469, %v470
    %v472 = vrot.slane %v471, 2
    %v473 = vadd.f32 %v471, %v472
    %v474 = vrot.slane %v473, 1
    %v475 = vadd.f32 %v473, %v474
    %v476 = vsel %vm188, %v468, 0.0
    %v477 = vrot.slane %v476, 4
    %v478 = vadd.f32 %v476, %v477
    %v479 = vrot.slane %v478, 2
    %v480 = vadd.f32 %v478, %v479
    %v481 = vrot.slane %v480, 1
    %v482 = vadd.f32 %v480, %v481
    %v483 = vld [vmem:[#allocation8] sm:$0x3]
    %v484 = vld [vmem:[#allocation16] sm:$0xff]
    %v485 = vld [vmem:[#allocation16 + $0x8] sm:$0xff]
    %v486 = vld [vmem:[#allocation16 + $0x10] sm:$0xff]
    %v487 = vld [vmem:[#allocation16 + $0x18] sm:$0xff]
    %v488 = vld [vmem:[%s12] sm:$0x1]
    %v490 = vlaneseq
    %v491 = vshrl.u32 %v490, 7
    %v492 = vsub.s32 0, %v491
    %v493 = vrot.slane %v488, %v492
    %495 = vmatprep.subr.mxu0 0.0
    %496 = vmatpush1.msra.mxu0 %v484
    %497 = vmatprep.subr.mxu0 0.0
    %498 = vmatpush1.msra.mxu0 %v485
    %499 = vmatprep.subr.mxu0 0.0
    %500 = vmatpush1.msra.mxu0 %v486
    %501 = vmatprep.subr.mxu0 0.0
    %502 = vmatpush1.msra.mxu0 %v487
    %503 = vmatprep.subr.mxu0 0.0
    %504 = vmatpush1.msra.mxu0 0.0
    %505 = vmatprep.subr.mxu0 0.0
    %506 = vmatpush1.msra.mxu0 0.0
    %507 = vmatprep.subr.mxu0 0.0
    %508 = vmatpush1.msra.mxu0 0.0
    %509 = vmatprep.subr.mxu0 0.0
    %510 = vmatpush1.msra.mxu0 0.0
    %511 = vmatprep.subr.mxu0 0.0
    %512 = vmatpush1.msra.mxu0 0.0
    %513 = vmatprep.subr.mxu0 0.0
    %514 = vmatpush1.msra.mxu0 0.0
    %515 = vmatprep.subr.mxu0 0.0
    %516 = vmatpush1.msra.mxu0 0.0
    %517 = vmatprep.subr.mxu0 0.0
    %518 = vmatpush1.msra.mxu0 0.0
    %519 = vmatprep.subr.mxu0 0.0
    %520 = vmatpush1.msra.mxu0 0.0
    %521 = vmatprep.subr.mxu0 0.0
    %522 = vmatpush1.msra.mxu0 0.0
    %523 = vmatprep.subr.mxu0 0.0
    %524 = vmatpush1.msra.mxu0 0.0
    %525 = vmatprep.subr.mxu0 0.0
    %526 = vmatpush1.msra.mxu0 0.0
    %527 = vmatprep.subr.mxu0 0.0
    %528 = vmatpush1.msra.mxu0 0.0
    %529 = vmatprep.subr.mxu0 0.0
    %530 = vmatpush1.msra.mxu0 0.0
    %531 = vmatprep.subr.mxu0 0.0
    %532 = vmatpush1.msra.mxu0 0.0
    %533 = vmatprep.subr.mxu0 0.0
    %534 = vmatpush1.msra.mxu0 0.0
    %535 = vmatprep.subr.mxu0 0.0
    %536 = vmatpush1.msra.mxu0 0.0
    %537 = vmatprep.subr.mxu0 0.0
    %538 = vmatpush1.msra.mxu0 0.0
    %539 = vmatprep.subr.mxu0 0.0
    %540 = vmatpush1.msra.mxu0 0.0
    %541 = vmatprep.subr.mxu0 0.0
    %542 = vmatpush1.msra.mxu0 0.0
    %543 = vmatprep.subr.mxu0 0.0
    %544 = vmatpush1.msra.mxu0 0.0
    %545 = vmatprep.subr.mxu0 0.0
    %546 = vmatpush1.msra.mxu0 0.0
    %547 = vmatprep.subr.mxu0 0.0
    %548 = vmatpush1.msra.mxu0 0.0
    %549 = vmatprep.subr.mxu0 0.0
    %550 = vmatpush1.msra.mxu0 0.0
    %551 = vmatprep.subr.mxu0 0.0
    %552 = vmatpush1.msra.mxu0 0.0
    %553 = vmatprep.subr.mxu0 0.0
    %554 = vmatpush1.msra.mxu0 0.0
    %555 = vmatprep.subr.mxu0 0.0
    %556 = vmatpush1.msra.mxu0 0.0
    %557 = vmatprep.subr.mxu0 0.0
    %558 = vmatpush1.msra.mxu0 0.0
    %559 = vmatprep.mubr.f32.mxu0 0.0
    %560 = vmatmul.mubr.f32.gmra.mrb[0].mxu0 %v190
    %v561 = vpop.f32.mrb[0].mxu0
    %v562 = vadd.f32 %v493, %v561
    %v563 = vpop.f32.mrb[0].mxu0
    %564 = vdwg.mxu0
    %s565 = scalar_lea.vmem [#allocation5], 2
    %v566 = vld [vmem:[%s565] sm:$0x3]
    %s567 = scalar_lea.vmem [#allocation16], 32
    %v568 = vld [vmem:[%s567] sm:$0xff]
    %v569 = vld [vmem:[%s567 + $0x8] sm:$0xff]
    %v570 = vld [vmem:[%s567 + $0x10] sm:$0xff]
    %v571 = vld [vmem:[%s567 + $0x18] sm:$0xff]
    %s572 = scalar_lea.vmem %s12, 1
    %v573 = vld [vmem:[%s572] sm:$0x1]
    %v575 = vlaneseq
    %v576 = vshrl.u32 %v575, 7
    %v577 = vsub.s32 0, %v576
    %v578 = vrot.slane %v573, %v577
    %v581 = vsel %vm188, %v566, 0
    %583 = vmatprep.subr.mxu0 0.0
    %584 = vmatpush1.msra.mxu0 %v568
    %585 = vmatprep.subr.mxu0 0.0
    %586 = vmatpush1.msra.mxu0 %v569
    %587 = vmatprep.subr.mxu0 0.0
    %588 = vmatpush1.msra.mxu0 %v570
    %589 = vmatprep.subr.mxu0 0.0
    %590 = vmatpush1.msra.mxu0 %v571
    %591 = vmatprep.subr.mxu0 0.0
    %592 = vmatpush1.msra.mxu0 0.0
    %593 = vmatprep.subr.mxu0 0.0
    %594 = vmatpush1.msra.mxu0 0.0
    %595 = vmatprep.subr.mxu0 0.0
    %596 = vmatpush1.msra.mxu0 0.0
    %597 = vmatprep.subr.mxu0 0.0
    %598 = vmatpush1.msra.mxu0 0.0
    %599 = vmatprep.subr.mxu0 0.0
    %600 = vmatpush1.msra.mxu0 0.0
    %601 = vmatprep.subr.mxu0 0.0
    %602 = vmatpush1.msra.mxu0 0.0
    %603 = vmatprep.subr.mxu0 0.0
    %604 = vmatpush1.msra.mxu0 0.0
    %605 = vmatprep.subr.mxu0 0.0
    %606 = vmatpush1.msra.mxu0 0.0
    %607 = vmatprep.subr.mxu0 0.0
    %608 = vmatpush1.msra.mxu0 0.0
    %609 = vmatprep.subr.mxu0 0.0
    %610 = vmatpush1.msra.mxu0 0.0
    %611 = vmatprep.subr.mxu0 0.0
    %612 = vmatpush1.msra.mxu0 0.0
    %613 = vmatprep.subr.mxu0 0.0
    %614 = vmatpush1.msra.mxu0 0.0
    %615 = vmatprep.subr.mxu0 0.0
    %616 = vmatpush1.msra.mxu0 0.0
    %617 = vmatprep.subr.mxu0 0.0
    %618 = vmatpush1.msra.mxu0 0.0
    %619 = vmatprep.subr.mxu0 0.0
    %620 = vmatpush1.msra.mxu0 0.0
    %621 = vmatprep.subr.mxu0 0.0
    %622 = vmatpush1.msra.mxu0 0.0
    %623 = vmatprep.subr.mxu0 0.0
    %624 = vmatpush1.msra.mxu0 0.0
    %625 = vmatprep.subr.mxu0 0.0
    %626 = vmatpush1.msra.mxu0 0.0
    %627 = vmatprep.subr.mxu0 0.0
    %628 = vmatpush1.msra.mxu0 0.0
    %629 = vmatprep.subr.mxu0 0.0
    %630 = vmatpush1.msra.mxu0 0.0
    %631 = vmatprep.subr.mxu0 0.0
    %632 = vmatpush1.msra.mxu0 0.0
    %633 = vmatprep.subr.mxu0 0.0
    %634 = vmatpush1.msra.mxu0 0.0
    %635 = vmatprep.subr.mxu0 0.0
    %636 = vmatpush1.msra.mxu0 0.0
    %637 = vmatprep.subr.mxu0 0.0
    %638 = vmatpush1.msra.mxu0 0.0
    %639 = vmatprep.subr.mxu0 0.0
    %640 = vmatpush1.msra.mxu0 0.0
    %641 = vmatprep.subr.mxu0 0.0
    %642 = vmatpush1.msra.mxu0 0.0
    %643 = vmatprep.subr.mxu0 0.0
    %644 = vmatpush1.msra.mxu0 0.0
    %645 = vmatprep.subr.mxu0 0.0
    %646 = vmatpush1.msra.mxu0 0.0
    %647 = vmatprep.mubr.f32.mxu0 0.0
    %648 = vmatmul.mubr.f32.gmra.mrb[0].mxu0 %v581
    %v649 = vpop.f32.mrb[0].mxu0
    %v650 = vadd.f32 %v578, %v649
    %v651 = vpop.f32.mrb[0].mxu0
    %652 = vdwg.mxu0
    %s653 = scalar_lea.vmem [#allocation5], 4
    %v654 = vld [vmem:[%s653] sm:$0x3]
    %s655 = scalar_lea.vmem [#allocation16], 64
    %v656 = vld [vmem:[%s655] sm:$0xff]
    %v657 = vld [vmem:[%s655 + $0x8] sm:$0xff]
    %v658 = vld [vmem:[%s655 + $0x10] sm:$0xff]
    %v659 = vld [vmem:[%s655 + $0x18] sm:$0xff]
    %s660 = scalar_lea.vmem %s12, 2
    %v661 = vld [vmem:[%s660] sm:$0x1]
    %v663 = vlaneseq
    %v664 = vshrl.u32 %v663, 7
    %v665 = vsub.s32 0, %v664
    %v666 = vrot.slane %v661, %v665
    %v669 = vsel %vm188, %v654, 0
    %671 = vmatprep.subr.mxu0 0.0
    %672 = vmatpush1.msra.mxu0 %v656
    %673 = vmatprep.subr.mxu0 0.0
    %674 = vmatpush1.msra.mxu0 %v657
    %675 = vmatprep.subr.mxu0 0.0
    %676 = vmatpush1.msra.mxu0 %v658
    %677 = vmatprep.subr.mxu0 0.0
    %678 = vmatpush1.msra.mxu0 %v659
    %679 = vmatprep.subr.mxu0 0.0
    %680 = vmatpush1.msra.mxu0 0.0
    %681 = vmatprep.subr.mxu0 0.0
    %682 = vmatpush1.msra.mxu0 0.0
    %683 = vmatprep.subr.mxu0 0.0
    %684 = vmatpush1.msra.mxu0 0.0
    %685 = vmatprep.subr.mxu0 0.0
    %686 = vmatpush1.msra.mxu0 0.0
    %687 = vmatprep.subr.mxu0 0.0
    %688 = vmatpush1.msra.mxu0 0.0
    %689 = vmatprep.subr.mxu0 0.0
    %690 = vmatpush1.msra.mxu0 0.0
    %691 = vmatprep.subr.mxu0 0.0
    %692 = vmatpush1.msra.mxu0 0.0
    %693 = vmatprep.subr.mxu0 0.0
    %694 = vmatpush1.msra.mxu0 0.0
    %695 = vmatprep.subr.mxu0 0.0
    %696 = vmatpush1.msra.mxu0 0.0
    %697 = vmatprep.subr.mxu0 0.0
    %698 = vmatpush1.msra.mxu0 0.0
    %699 = vmatprep.subr.mxu0 0.0
    %700 = vmatpush1.msra.mxu0 0.0
    %701 = vmatprep.subr.mxu0 0.0
    %702 = vmatpush1.msra.mxu0 0.0
    %703 = vmatprep.subr.mxu0 0.0
    %704 = vmatpush1.msra.mxu0 0.0
    %705 = vmatprep.subr.mxu0 0.0
    %706 = vmatpush1.msra.mxu0 0.0
    %707 = vmatprep.subr.mxu0 0.0
    %708 = vmatpush1.msra.mxu0 0.0
    %709 = vmatprep.subr.mxu0 0.0
    %710 = vmatpush1.msra.mxu0 0.0
    %711 = vmatprep.subr.mxu0 0.0
    %712 = vmatpush1.msra.mxu0 0.0
    %713 = vmatprep.subr.mxu0 0.0
    %714 = vmatpush1.msra.mxu0 0.0
    %715 = vmatprep.subr.mxu0 0.0
    %716 = vmatpush1.msra.mxu0 0.0
    %717 = vmatprep.subr.mxu0 0.0
    %718 = vmatpush1.msra.mxu0 0.0
    %719 = vmatprep.subr.mxu0 0.0
    %720 = vmatpush1.msra.mxu0 0.0
    %721 = vmatprep.subr.mxu0 0.0
    %722 = vmatpush1.msra.mxu0 0.0
    %723 = vmatprep.subr.mxu0 0.0
    %724 = vmatpush1.msra.mxu0 0.0
    %725 = vmatprep.subr.mxu0 0.0
    %726 = vmatpush1.msra.mxu0 0.0
    %727 = vmatprep.subr.mxu0 0.0
    %728 = vmatpush1.msra.mxu0 0.0
    %729 = vmatprep.subr.mxu0 0.0
    %730 = vmatpush1.msra.mxu0 0.0
    %731 = vmatprep.subr.mxu0 0.0
    %732 = vmatpush1.msra.mxu0 0.0
    %733 = vmatprep.subr.mxu0 0.0
    %734 = vmatpush1.msra.mxu0 0.0
    %735 = vmatprep.mubr.f32.mxu0 0.0
    %736 = vmatmul.mubr.f32.gmra.mrb[0].mxu0 %v669
    %v737 = vpop.f32.mrb[0].mxu0
    %v738 = vadd.f32 %v666, %v737
    %v739 = vpop.f32.mrb[0].mxu0
    %740 = vdwg.mxu0
    %s741 = scalar_lea.vmem [#allocation5], 6
    %v742 = vld [vmem:[%s741] sm:$0x3]
    %s743 = scalar_lea.vmem [#allocation16], 96
    %v744 = vld [vmem:[%s743] sm:$0xff]
    %v745 = vld [vmem:[%s743 + $0x8] sm:$0xff]
    %v746 = vld [vmem:[%s743 + $0x10] sm:$0xff]
    %v747 = vld [vmem:[%s743 + $0x18] sm:$0xff]
    %s748 = scalar_lea.vmem %s12, 3
    %v749 = vld [vmem:[%s748] sm:$0x1]
    %v751 = vlaneseq
    %v752 = vshrl.u32 %v751, 7
    %v753 = vsub.s32 0, %v752
    %v754 = vrot.slane %v749, %v753
    %v757 = vsel %vm188, %v742, 0
    %759 = vmatprep.subr.mxu0 0.0
    %760 = vmatpush1.msra.mxu0 %v744
    %761 = vmatprep.subr.mxu0 0.0
    %762 = vmatpush1.msra.mxu0 %v745
    %763 = vmatprep.subr.mxu0 0.0
    %764 = vmatpush1.msra.mxu0 %v746
    %765 = vmatprep.subr.mxu0 0.0
    %766 = vmatpush1.msra.mxu0 %v747
    %767 = vmatprep.subr.mxu0 0.0
    %768 = vmatpush1.msra.mxu0 0.0
    %769 = vmatprep.subr.mxu0 0.0
    %770 = vmatpush1.msra.mxu0 0.0
    %771 = vmatprep.subr.mxu0 0.0
    %772 = vmatpush1.msra.mxu0 0.0
    %773 = vmatprep.subr.mxu0 0.0
    %774 = vmatpush1.msra.mxu0 0.0
    %775 = vmatprep.subr.mxu0 0.0
    %776 = vmatpush1.msra.mxu0 0.0
    %777 = vmatprep.subr.mxu0 0.0
    %778 = vmatpush1.msra.mxu0 0.0
    %779 = vmatprep.subr.mxu0 0.0
    %780 = vmatpush1.msra.mxu0 0.0
    %781 = vmatprep.subr.mxu0 0.0
    %782 = vmatpush1.msra.mxu0 0.0
    %783 = vmatprep.subr.mxu0 0.0
    %784 = vmatpush1.msra.mxu0 0.0
    %785 = vmatprep.subr.mxu0 0.0
    %786 = vmatpush1.msra.mxu0 0.0
    %787 = vmatprep.subr.mxu0 0.0
    %788 = vmatpush1.msra.mxu0 0.0
    %789 = vmatprep.subr.mxu0 0.0
    %790 = vmatpush1.msra.mxu0 0.0
    %791 = vmatprep.subr.mxu0 0.0
    %792 = vmatpush1.msra.mxu0 0.0
    %793 = vmatprep.subr.mxu0 0.0
    %794 = vmatpush1.msra.mxu0 0.0
    %795 = vmatprep.subr.mxu0 0.0
    %796 = vmatpush1.msra.mxu0 0.0
    %797 = vmatprep.subr.mxu0 0.0
    %798 = vmatpush1.msra.mxu0 0.0
    %799 = vmatprep.subr.mxu0 0.0
    %800 = vmatpush1.msra.mxu0 0.0
    %801 = vmatprep.subr.mxu0 0.0
    %802 = vmatpush1.msra.mxu0 0.0
    %803 = vmatprep.subr.mxu0 0.0
    %804 = vmatpush1.msra.mxu0 0.0
    %805 = vmatprep.subr.mxu0 0.0
    %806 = vmatpush1.msra.mxu0 0.0
    %807 = vmatprep.subr.mxu0 0.0
    %808 = vmatpush1.msra.mxu0 0.0
    %809 = vmatprep.subr.mxu0 0.0
    %810 = vmatpush1.msra.mxu0 0.0
    %811 = vmatprep.subr.mxu0 0.0
    %812 = vmatpush1.msra.mxu0 0.0
    %813 = vmatprep.subr.mxu0 0.0
    %814 = vmatpush1.msra.mxu0 0.0
    %815 = vmatprep.subr.mxu0 0.0
    %816 = vmatpush1.msra.mxu0 0.0
    %817 = vmatprep.subr.mxu0 0.0
    %818 = vmatpush1.msra.mxu0 0.0
    %819 = vmatprep.subr.mxu0 0.0
    %820 = vmatpush1.msra.mxu0 0.0
    %821 = vmatprep.subr.mxu0 0.0
    %822 = vmatpush1.msra.mxu0 0.0
    %823 = vmatprep.mubr.f32.mxu0 0.0
    %824 = vmatmul.mubr.f32.gmra.mrb[0].mxu0 %v757
    %v825 = vpop.f32.mrb[0].mxu0
    %v826 = vadd.f32 %v754, %v825
    %v827 = vpop.f32.mrb[0].mxu0
    %828 = vdwg.mxu0
    %v829 = vld [vmem:[#allocation11] sm:$0xff]
    %v830 = vld [vmem:[#allocation11 + $0x8] sm:$0xff]
    %v831 = vld [vmem:[#allocation11 + $0x10] sm:$0xff]
    %v832 = vld [vmem:[#allocation11 + $0x18] sm:$0xff]
    %v833 = vld [vmem:[#allocation13] sm:$0xff]
    %v834 = vld [vmem:[#allocation13 + $0x8] sm:$0xff]
    %v835 = vld [vmem:[#allocation13 + $0x10] sm:$0xff]
    %v836 = vld [vmem:[#allocation13 + $0x18] sm:$0xff]
    %v839 = vsel %vm397, %v482, %v475
    %v840 = vsel %vm188, %v839, 0
    %842 = vmatprep.subr.mxu0 0.0
    %843 = vmatpush1.msra.mxu0 %v833
    %844 = vmatprep.subr.mxu0 0.0
    %845 = vmatpush1.msra.mxu0 %v834
    %846 = vmatprep.subr.mxu0 0.0
    %847 = vmatpush1.msra.mxu0 %v835
    %848 = vmatprep.subr.mxu0 0.0
    %849 = vmatpush1.msra.mxu0 %v836
    %850 = vmatprep.subr.mxu0 0.0
    %851 = vmatpush1.msra.mxu0 0.0
    %852 = vmatprep.subr.mxu0 0.0
    %853 = vmatpush1.msra.mxu0 0.0
    %854 = vmatprep.subr.mxu0 0.0
    %855 = vmatpush1.msra.mxu0 0.0
    %856 = vmatprep.subr.mxu0 0.0
    %857 = vmatpush1.msra.mxu0 0.0
    %858 = vmatprep.subr.mxu0 0.0
    %859 = vmatpush1.msra.mxu0 0.0
    %860 = vmatprep.subr.mxu0 0.0
    %861 = vmatpush1.msra.mxu0 0.0
    %862 = vmatprep.subr.mxu0 0.0
    %863 = vmatpush1.msra.mxu0 0.0
    %864 = vmatprep.subr.mxu0 0.0
    %865 = vmatpush1.msra.mxu0 0.0
    %866 = vmatprep.subr.mxu0 0.0
    %867 = vmatpush1.msra.mxu0 0.0
    %868 = vmatprep.subr.mxu0 0.0
    %869 = vmatpush1.msra.mxu0 0.0
    %870 = vmatprep.subr.mxu0 0.0
    %871 = vmatpush1.msra.mxu0 0.0
    %872 = vmatprep.subr.mxu0 0.0
    %873 = vmatpush1.msra.mxu0 0.0
    %874 = vmatprep.subr.mxu0 0.0
    %875 = vmatpush1.msra.mxu0 0.0
    %876 = vmatprep.subr.mxu0 0.0
    %877 = vmatpush1.msra.mxu0 0.0
    %878 = vmatprep.subr.mxu0 0.0
    %879 = vmatpush1.msra.mxu0 0.0
    %880 = vmatprep.subr.mxu0 0.0
    %881 = vmatpush1.msra.mxu0 0.0
    %882 = vmatprep.subr.mxu0 0.0
    %883 = vmatpush1.msra.mxu0 0.0
    %884 = vmatprep.subr.mxu0 0.0
    %885 = vmatpush1.msra.mxu0 0.0
    %886 = vmatprep.subr.mxu0 0.0
    %887 = vmatpush1.msra.mxu0 0.0
    %888 = vmatprep.subr.mxu0 0.0
    %889 = vmatpush1.msra.mxu0 0.0
    %890 = vmatprep.subr.mxu0 0.0
    %891 = vmatpush1.msra.mxu0 0.0
    %892 = vmatprep.subr.mxu0 0.0
    %893 = vmatpush1.msra.mxu0 0.0
    %894 = vmatprep.subr.mxu0 0.0
    %895 = vmatpush1.msra.mxu0 0.0
    %896 = vmatprep.subr.mxu0 0.0
    %897 = vmatpush1.msra.mxu0 0.0
    %898 = vmatprep.subr.mxu0 0.0
    %899 = vmatpush1.msra.mxu0 0.0
    %900 = vmatprep.subr.mxu0 0.0
    %901 = vmatpush1.msra.mxu0 0.0
    %902 = vmatprep.subr.mxu0 0.0
    %903 = vmatpush1.msra.mxu0 0.0
    %904 = vmatprep.subr.mxu0 0.0
    %905 = vmatpush1.msra.mxu0 0.0
    %906 = vmatprep.mubr.f32.mxu0 0.0
    %907 = vmatmul.mubr.f32.gmra.mrb[0].mxu0 %v840
    %v908 = vpop.f32.mrb[0].mxu0
    %v909 = vadd.f32 0.0, %v908
    %v910 = vpop.f32.mrb[0].mxu0
    %911 = vdwg.mxu0
    %v913 = vsel %vm188, %v483, 0
    %915 = vmatprep.subr.mxu0 0.0
    %916 = vmatpush1.msra.mxu0 %v829
    %917 = vmatprep.subr.mxu0 0.0
    %918 = vmatpush1.msra.mxu0 %v830
    %919 = vmatprep.subr.mxu0 0.0
    %920 = vmatpush1.msra.mxu0 %v831
    %921 = vmatprep.subr.mxu0 0.0
    %922 = vmatpush1.msra.mxu0 %v832
    %923 = vmatprep.subr.mxu0 0.0
    %924 = vmatpush1.msra.mxu0 0.0
    %925 = vmatprep.subr.mxu0 0.0
    %926 = vmatpush1.msra.mxu0 0.0
    %927 = vmatprep.subr.mxu0 0.0
    %928 = vmatpush1.msra.mxu0 0.0
    %929 = vmatprep.subr.mxu0 0.0
    %930 = vmatpush1.msra.mxu0 0.0
    %931 = vmatprep.subr.mxu0 0.0
    %932 = vmatpush1.msra.mxu0 0.0
    %933 = vmatprep.subr.mxu0 0.0
    %934 = vmatpush1.msra.mxu0 0.0
    %935 = vmatprep.subr.mxu0 0.0
    %936 = vmatpush1.msra.mxu0 0.0
    %937 = vmatprep.subr.mxu0 0.0
    %938 = vmatpush1.msra.mxu0 0.0
    %939 = vmatprep.subr.mxu0 0.0
    %940 = vmatpush1.msra.mxu0 0.0
    %941 = vmatprep.subr.mxu0 0.0
    %942 = vmatpush1.msra.mxu0 0.0
    %943 = vmatprep.subr.mxu0 0.0
    %944 = vmatpush1.msra.mxu0 0.0
    %945 = vmatprep.subr.mxu0 0.0
    %946 = vmatpush1.msra.mxu0 0.0
    %947 = vmatprep.subr.mxu0 0.0
    %948 = vmatpush1.msra.mxu0 0.0
    %949 = vmatprep.subr.mxu0 0.0
    %950 = vmatpush1.msra.mxu0 0.0
    %951 = vmatprep.subr.mxu0 0.0
    %952 = vmatpush1.msra.mxu0 0.0
    %953 = vmatprep.subr.mxu0 0.0
    %954 = vmatpush1.msra.mxu0 0.0
    %955 = vmatprep.subr.mxu0 0.0
    %956 = vmatpush1.msra.mxu0 0.0
    %957 = vmatprep.subr.mxu0 0.0
    %958 = vmatpush1.msra.mxu0 0.0
    %959 = vmatprep.subr.mxu0 0.0
    %960 = vmatpush1.msra.mxu0 0.0
    %961 = vmatprep.subr.mxu0 0.0
    %962 = vmatpush1.msra.mxu0 0.0
    %963 = vmatprep.subr.mxu0 0.0
    %964 = vmatpush1.msra.mxu0 0.0
    %965 = vmatprep.subr.mxu0 0.0
    %966 = vmatpush1.msra.mxu0 0.0
    %967 = vmatprep.subr.mxu0 0.0
    %968 = vmatpush1.msra.mxu0 0.0
    %969 = vmatprep.subr.mxu0 0.0
    %970 = vmatpush1.msra.mxu0 0.0
    %971 = vmatprep.subr.mxu0 0.0
    %972 = vmatpush1.msra.mxu0 0.0
    %973 = vmatprep.subr.mxu0 0.0
    %974 = vmatpush1.msra.mxu0 0.0
    %975 = vmatprep.subr.mxu0 0.0
    %976 = vmatpush1.msra.mxu0 0.0
    %977 = vmatprep.subr.mxu0 0.0
    %978 = vmatpush1.msra.mxu0 0.0
    %979 = vmatprep.mubr.f32.mxu0 0.0
    %980 = vmatmul.mubr.f32.gmra.mrb[0].mxu0 %v913
    %v981 = vpop.f32.mrb[0].mxu0
    %v982 = vadd.f32 %v909, %v981
    %v983 = vpop.f32.mrb[0].mxu0
    %984 = vdwg.mxu0
    %v985 = vadd.f32 %v982, %v562
    %v986 = vxor.u32 %v985, 2147483648
    %v987 = vmul.f32 %v986, 1.442695
    %v988 = vpow.pop %v987
    %v989 = vadd.f32 %v988, 1.0
    %v990 = vrcp.pop %v989
    %v991 = vmul.f32 1.0, %v990
    %v992 = vtanh.pop %v985
    %v993 = vld [vmem:[#allocation7] sm:$0x3]
    %995 = vrot.lane.b32.xlu0 %v993, 32
    %v996 = vpop.permute.xlu0 %995
    %v998 = vmul.f32 %v991, %v996
    %1000 = vrot.lane.b32.xlu0 %v992, 32
    %v1001 = vpop.permute.xlu0 %1000
    %v1003 = vmul.f32 %v991, %v1001
    %1005 = vrot.lane.b32.xlu0 %v1003, 32
    %v1006 = vpop.permute.xlu0 %1005
    %v1008 = vadd.f32 %v998, %v1006
    %v1009 = vtanh.pop %v1008
    %1011 = vrot.lane.b32.xlu0 %v1009, 32
    %v1012 = vpop.permute.xlu0 %1011
    %v1014 = vmul.f32 %v991, %v1012
    %v1015 = vld [vmem:[#allocation14] sm:$0xff]
    %v1016 = vld [vmem:[#allocation14 + $0x8] sm:$0xff]
    %v1017 = vld [vmem:[#allocation14 + $0x10] sm:$0xff]
    %v1018 = vld [vmem:[#allocation14 + $0x18] sm:$0xff]
    %1020 = vrot.lane.b32.xlu0 %v1014, 64
    %v1021 = vpop.permute.xlu0 %1020
    %v1022 = vsel %vm188, %v1021, 0
    %1024 = vmatprep.subr.mxu0 0.0
    %1025 = vmatpush1.msra.mxu0 %v1015
    %1026 = vmatprep.subr.mxu0 0.0
    %1027 = vmatpush1.msra.mxu0 %v1016
    %1028 = vmatprep.subr.mxu0 0.0
    %1029 = vmatpush1.msra.mxu0 %v1017
    %1030 = vmatprep.subr.mxu0 0.0
    %1031 = vmatpush1.msra.mxu0 %v1018
    %1032 = vmatprep.subr.mxu0 0.0
    %1033 = vmatpush1.msra.mxu0 0.0
    %1034 = vmatprep.subr.mxu0 0.0
    %1035 = vmatpush1.msra.mxu0 0.0
    %1036 = vmatprep.subr.mxu0 0.0
    %1037 = vmatpush1.msra.mxu0 0.0
    %1038 = vmatprep.subr.mxu0 0.0
    %1039 = vmatpush1.msra.mxu0 0.0
    %1040 = vmatprep.subr.mxu0 0.0
    %1041 = vmatpush1.msra.mxu0 0.0
    %1042 = vmatprep.subr.mxu0 0.0
    %1043 = vmatpush1.msra.mxu0 0.0
    %1044 = vmatprep.subr.mxu0 0.0
    %1045 = vmatpush1.msra.mxu0 0.0
    %1046 = vmatprep.subr.mxu0 0.0
    %1047 = vmatpush1.msra.mxu0 0.0
    %1048 = vmatprep.subr.mxu0 0.0
    %1049 = vmatpush1.msra.mxu0 0.0
    %1050 = vmatprep.subr.mxu0 0.0
    %1051 = vmatpush1.msra.mxu0 0.0
    %1052 = vmatprep.subr.mxu0 0.0
    %1053 = vmatpush1.msra.mxu0 0.0
    %1054 = vmatprep.subr.mxu0 0.0
    %1055 = vmatpush1.msra.mxu0 0.0
    %1056 = vmatprep.subr.mxu0 0.0
    %1057 = vmatpush1.msra.mxu0 0.0
    %1058 = vmatprep.subr.mxu0 0.0
    %1059 = vmatpush1.msra.mxu0 0.0
    %1060 = vmatprep.subr.mxu0 0.0
    %1061 = vmatpush1.msra.mxu0 0.0
    %1062 = vmatprep.subr.mxu0 0.0
    %1063 = vmatpush1.msra.mxu0 0.0
    %1064 = vmatprep.subr.mxu0 0.0
    %1065 = vmatpush1.msra.mxu0 0.0
    %1066 = vmatprep.subr.mxu0 0.0
    %1067 = vmatpush1.msra.mxu0 0.0
    %1068 = vmatprep.subr.mxu0 0.0
    %1069 = vmatpush1.msra.mxu0 0.0
    %1070 = vmatprep.subr.mxu0 0.0
    %1071 = vmatpush1.msra.mxu0 0.0
    %1072 = vmatprep.subr.mxu0 0.0
    %1073 = vmatpush1.msra.mxu0 0.0
    %1074 = vmatprep.subr.mxu0 0.0
    %1075 = vmatpush1.msra.mxu0 0.0
    %1076 = vmatprep.subr.mxu0 0.0
    %1077 = vmatpush1.msra.mxu0 0.0
    %1078 = vmatprep.subr.mxu0 0.0
    %1079 = vmatpush1.msra.mxu0 0.0
    %1080 = vmatprep.subr.mxu0 0.0
    %1081 = vmatpush1.msra.mxu0 0.0
    %1082 = vmatprep.subr.mxu0 0.0
    %1083 = vmatpush1.msra.mxu0 0.0
    %1084 = vmatprep.subr.mxu0 0.0
    %1085 = vmatpush1.msra.mxu0 0.0
    %1086 = vmatprep.subr.mxu0 0.0
    %1087 = vmatpush1.msra.mxu0 0.0
    %1088 = vmatprep.mubr.f32.mxu0 0.0
    %1089 = vmatmul.mubr.f32.gmra.mrb[0].mxu0 %v1022
    %v1090 = vpop.f32.mrb[0].mxu0
    %v1091 = vadd.f32 %v650, %v1090
    %v1092 = vpop.f32.mrb[0].mxu0
    %1093 = vdwg.mxu0
    %v1094 = vxor.u32 %v1091, 2147483648
    %v1095 = vmul.f32 %v1094, 1.442695
    %v1096 = vpow.pop %v1095
    %v1097 = vadd.f32 %v1096, 1.0
    %v1098 = vrcp.pop %v1097
    %v1099 = vmul.f32 1.0, %v1098
    %v1100 = vtanh.pop %v1091
    %s1101 = scalar_lea.vmem [#allocation7], 2
    %v1102 = vld [vmem:[%s1101] sm:$0x3]
    %1104 = vrot.lane.b32.xlu0 %v1102, 32
    %v1105 = vpop.permute.xlu0 %1104
    %v1107 = vmul.f32 %v1099, %v1105
    %1109 = vrot.lane.b32.xlu0 %v1100, 32
    %v1110 = vpop.permute.xlu0 %1109
    %v1112 = vmul.f32 %v1099, %v1110
    %1114 = vrot.lane.b32.xlu0 %v1112, 32
    %v1115 = vpop.permute.xlu0 %1114
    %v1117 = vadd.f32 %v1107, %v1115
    %v1118 = vtanh.pop %v1117
    %1120 = vrot.lane.b32.xlu0 %v1118, 32
    %v1121 = vpop.permute.xlu0 %1120
    %v1123 = vmul.f32 %v1099, %v1121
    %s1124 = scalar_lea.vmem [#allocation14], 32
    %v1125 = vld [vmem:[%s1124] sm:$0xff]
    %v1126 = vld [vmem:[%s1124 + $0x8] sm:$0xff]
    %v1127 = vld [vmem:[%s1124 + $0x10] sm:$0xff]
    %v1128 = vld [vmem:[%s1124 + $0x18] sm:$0xff]
    %1130 = vrot.lane.b32.xlu0 %v1123, 64
    %v1131 = vpop.permute.xlu0 %1130
    %v1132 = vsel %vm188, %v1131, 0
    %1134 = vmatprep.subr.mxu0 0.0
    %1135 = vmatpush1.msra.mxu0 %v1125
    %1136 = vmatprep.subr.mxu0 0.0
    %1137 = vmatpush1.msra.mxu0 %v1126
    %1138 = vmatprep.subr.mxu0 0.0
    %1139 = vmatpush1.msra.mxu0 %v1127
    %1140 = vmatprep.subr.mxu0 0.0
    %1141 = vmatpush1.msra.mxu0 %v1128
    %1142 = vmatprep.subr.mxu0 0.0
    %1143 = vmatpush1.msra.mxu0 0.0
    %1144 = vmatprep.subr.mxu0 0.0
    %1145 = vmatpush1.msra.mxu0 0.0
    %1146 = vmatprep.subr.mxu0 0.0
    %1147 = vmatpush1.msra.mxu0 0.0
    %1148 = vmatprep.subr.mxu0 0.0
    %1149 = vmatpush1.msra.mxu0 0.0
    %1150 = vmatprep.subr.mxu0 0.0
    %1151 = vmatpush1.msra.mxu0 0.0
    %1152 = vmatprep.subr.mxu0 0.0
    %1153 = vmatpush1.msra.mxu0 0.0
    %1154 = vmatprep.subr.mxu0 0.0
    %1155 = vmatpush1.msra.mxu0 0.0
    %1156 = vmatprep.subr.mxu0 0.0
    %1157 = vmatpush1.msra.mxu0 0.0
    %1158 = vmatprep.subr.mxu0 0.0
    %1159 = vmatpush1.msra.mxu0 0.0
    %1160 = vmatprep.subr.mxu0 0.0
    %1161 = vmatpush1.msra.mxu0 0.0
    %1162 = vmatprep.subr.mxu0 0.0
    %1163 = vmatpush1.msra.mxu0 0.0
    %1164 = vmatprep.subr.mxu0 0.0
    %1165 = vmatpush1.msra.mxu0 0.0
    %1166 = vmatprep.subr.mxu0 0.0
    %1167 = vmatpush1.msra.mxu0 0.0
    %1168 = vmatprep.subr.mxu0 0.0
    %1169 = vmatpush1.msra.mxu0 0.0
    %1170 = vmatprep.subr.mxu0 0.0
    %1171 = vmatpush1.msra.mxu0 0.0
    %1172 = vmatprep.subr.mxu0 0.0
    %1173 = vmatpush1.msra.mxu0 0.0
    %1174 = vmatprep.subr.mxu0 0.0
    %1175 = vmatpush1.msra.mxu0 0.0
    %1176 = vmatprep.subr.mxu0 0.0
    %1177 = vmatpush1.msra.mxu0 0.0
    %1178 = vmatprep.subr.mxu0 0.0
    %1179 = vmatpush1.msra.mxu0 0.0
    %1180 = vmatprep.subr.mxu0 0.0
    %1181 = vmatpush1.msra.mxu0 0.0
    %1182 = vmatprep.subr.mxu0 0.0
    %1183 = vmatpush1.msra.mxu0 0.0
    %1184 = vmatprep.subr.mxu0 0.0
    %1185 = vmatpush1.msra.mxu0 0.0
    %1186 = vmatprep.subr.mxu0 0.0
    %1187 = vmatpush1.msra.mxu0 0.0
    %1188 = vmatprep.subr.mxu0 0.0
    %1189 = vmatpush1.msra.mxu0 0.0
    %1190 = vmatprep.subr.mxu0 0.0
    %1191 = vmatpush1.msra.mxu0 0.0
    %1192 = vmatprep.subr.mxu0 0.0
    %1193 = vmatpush1.msra.mxu0 0.0
    %1194 = vmatprep.subr.mxu0 0.0
    %1195 = vmatpush1.msra.mxu0 0.0
    %1196 = vmatprep.subr.mxu0 0.0
    %1197 = vmatpush1.msra.mxu0 0.0
    %1198 = vmatprep.mubr.f32.mxu0 0.0
    %1199 = vmatmul.mubr.f32.gmra.mrb[0].mxu0 %v1132
    %v1200 = vpop.f32.mrb[0].mxu0
    %v1201 = vadd.f32 %v738, %v1200
    %v1202 = vpop.f32.mrb[0].mxu0
    %1203 = vdwg.mxu0
    %v1204 = vxor.u32 %v1201, 2147483648
    %v1205 = vmul.f32 %v1204, 1.442695
    %v1206 = vpow.pop %v1205
    %v1207 = vadd.f32 %v1206, 1.0
    %v1208 = vrcp.pop %v1207
    %v1209 = vmul.f32 1.0, %v1208
    %v1210 = vtanh.pop %v1201
    %s1211 = scalar_lea.vmem [#allocation7], 4
    %v1212 = vld [vmem:[%s1211] sm:$0x3]
    %1214 = vrot.lane.b32.xlu0 %v1212, 32
    %v1215 = vpop.permute.xlu0 %1214
    %v1217 = vmul.f32 %v1209, %v1215
    %1219 = vrot.lane.b32.xlu0 %v1210, 32
    %v1220 = vpop.permute.xlu0 %1219
    %v1222 = vmul.f32 %v1209, %v1220
    %1224 = vrot.lane.b32.xlu0 %v1222, 32
    %v1225 = vpop.permute.xlu0 %1224
    %v1227 = vadd.f32 %v1217, %v1225
    %v1228 = vtanh.pop %v1227
    %1230 = vrot.lane.b32.xlu0 %v1228, 32
    %v1231 = vpop.permute.xlu0 %1230
    %v1233 = vmul.f32 %v1209, %v1231
    %s1234 = scalar_lea.vmem [#allocation14], 64
    %v1235 = vld [vmem:[%s1234] sm:$0xff]
    %v1236 = vld [vmem:[%s1234 + $0x8] sm:$0xff]
    %v1237 = vld [vmem:[%s1234 + $0x10] sm:$0xff]
    %v1238 = vld [vmem:[%s1234 + $0x18] sm:$0xff]
    %1240 = vrot.lane.b32.xlu0 %v1233, 64
    %v1241 = vpop.permute.xlu0 %1240
    %v1242 = vsel %vm188, %v1241, 0
    %1244 = vmatprep.subr.mxu0 0.0
    %1245 = vmatpush1.msra.mxu0 %v1235
    %1246 = vmatprep.subr.mxu0 0.0
    %1247 = vmatpush1.msra.mxu0 %v1236
    %1248 = vmatprep.subr.mxu0 0.0
    %1249 = vmatpush1.msra.mxu0 %v1237
    %1250 = vmatprep.subr.mxu0 0.0
    %1251 = vmatpush1.msra.mxu0 %v1238
    %1252 = vmatprep.subr.mxu0 0.0
    %1253 = vmatpush1.msra.mxu0 0.0
    %1254 = vmatprep.subr.mxu0 0.0
    %1255 = vmatpush1.msra.mxu0 0.0
    %1256 = vmatprep.subr.mxu0 0.0
    %1257 = vmatpush1.msra.mxu0 0.0
    %1258 = vmatprep.subr.mxu0 0.0
    %1259 = vmatpush1.msra.mxu0 0.0
    %1260 = vmatprep.subr.mxu0 0.0
    %1261 = vmatpush1.msra.mxu0 0.0
    %1262 = vmatprep.subr.mxu0 0.0
    %1263 = vmatpush1.msra.mxu0 0.0
    %1264 = vmatprep.subr.mxu0 0.0
    %1265 = vmatpush1.msra.mxu0 0.0
    %1266 = vmatprep.subr.mxu0 0.0
    %1267 = vmatpush1.msra.mxu0 0.0
    %1268 = vmatprep.subr.mxu0 0.0
    %1269 = vmatpush1.msra.mxu0 0.0
    %1270 = vmatprep.subr.mxu0 0.0
    %1271 = vmatpush1.msra.mxu0 0.0
    %1272 = vmatprep.subr.mxu0 0.0
    %1273 = vmatpush1.msra.mxu0 0.0
    %1274 = vmatprep.subr.mxu0 0.0
    %1275 = vmatpush1.msra.mxu0 0.0
    %1276 = vmatprep.subr.mxu0 0.0
    %1277 = vmatpush1.msra.mxu0 0.0
    %1278 = vmatprep.subr.mxu0 0.0
    %1279 = vmatpush1.msra.mxu0 0.0
    %1280 = vmatprep.subr.mxu0 0.0
    %1281 = vmatpush1.msra.mxu0 0.0
    %1282 = vmatprep.subr.mxu0 0.0
    %1283 = vmatpush1.msra.mxu0 0.0
    %1284 = vmatprep.subr.mxu0 0.0
    %1285 = vmatpush1.msra.mxu0 0.0
    %1286 = vmatprep.subr.mxu0 0.0
    %1287 = vmatpush1.msra.mxu0 0.0
    %1288 = vmatprep.subr.mxu0 0.0
    %1289 = vmatpush1.msra.mxu0 0.0
    %1290 = vmatprep.subr.mxu0 0.0
    %1291 = vmatpush1.msra.mxu0 0.0
    %1292 = vmatprep.subr.mxu0 0.0
    %1293 = vmatpush1.msra.mxu0 0.0
    %1294 = vmatprep.subr.mxu0 0.0
    %1295 = vmatpush1.msra.mxu0 0.0
    %1296 = vmatprep.subr.mxu0 0.0
    %1297 = vmatpush1.msra.mxu0 0.0
    %1298 = vmatprep.subr.mxu0 0.0
    %1299 = vmatpush1.msra.mxu0 0.0
    %1300 = vmatprep.subr.mxu0 0.0
    %1301 = vmatpush1.msra.mxu0 0.0
    %1302 = vmatprep.subr.mxu0 0.0
    %1303 = vmatpush1.msra.mxu0 0.0
    %1304 = vmatprep.subr.mxu0 0.0
    %1305 = vmatpush1.msra.mxu0 0.0
    %1306 = vmatprep.subr.mxu0 0.0
    %1307 = vmatpush1.msra.mxu0 0.0
    %1308 = vmatprep.mubr.f32.mxu0 0.0
    %1309 = vmatmul.mubr.f32.gmra.mrb[0].mxu0 %v1242
    %v1310 = vpop.f32.mrb[0].mxu0
    %v1311 = vadd.f32 %v826, %v1310
    %v1312 = vpop.f32.mrb[0].mxu0
    %1313 = vdwg.mxu0
    %v1314 = vxor.u32 %v1311, 2147483648
    %v1315 = vmul.f32 %v1314, 1.442695
    %v1316 = vpow.pop %v1315
    %v1317 = vadd.f32 %v1316, 1.0
    %v1318 = vrcp.pop %v1317
    %v1319 = vmul.f32 1.0, %v1318
    %v1320 = vtanh.pop %v1311
    %s1321 = scalar_lea.vmem [#allocation7], 6
    %v1322 = vld [vmem:[%s1321] sm:$0x3]
    %1324 = vrot.lane.b32.xlu0 %v1322, 32
    %v1325 = vpop.permute.xlu0 %1324
    %v1327 = vmul.f32 %v1319, %v1325
    %1329 = vrot.lane.b32.xlu0 %v1320, 32
    %v1330 = vpop.permute.xlu0 %1329
    %v1332 = vmul.f32 %v1319, %v1330
    %1334 = vrot.lane.b32.xlu0 %v1332, 32
    %v1335 = vpop.permute.xlu0 %1334
    %v1337 = vadd.f32 %v1327, %v1335
    %v1338 = vtanh.pop %v1337
    %1340 = vrot.lane.b32.xlu0 %v1338, 32
    %v1341 = vpop.permute.xlu0 %1340
    %v1343 = vmul.f32 %v1319, %v1341
    %1345 = vrot.lane.b32.xlu0 %v1123, 96
    %v1346 = vpop.permute.xlu0 %1345
    %1349 = vrot.lane.b32.xlu0 %v1343, 32
    %v1350 = vpop.permute.xlu0 %1349
    %v1352 = vsel %vm188, %v1021, %v1346
    %vm1353 = vcmask 523264
    %v1354 = vsel %vm1353, %v1352, %v1233
    %vm1355 = vcmask 785408
    %v1356 = vsel %vm1355, %v1354, %v1350
    %1357 = vst [vmem:[#allocation18] sm:$0x3] %v1356
    %1359 = vrot.lane.b32.xlu0 %v1008, 96
    %v1360 = vpop.permute.xlu0 %1359
    %1363 = vrot.lane.b32.xlu0 %v1227, 32
    %v1364 = vpop.permute.xlu0 %1363
    %1367 = vrot.lane.b32.xlu0 %v1337, 64
    %v1368 = vpop.permute.xlu0 %1367
    %v1370 = vsel %vm188, %v1360, %v1117
    %v1371 = vsel %vm1353, %v1370, %v1364
    %v1372 = vsel %vm1355, %v1371, %v1368
    %1373 = vst [vmem:[#allocation20] sm:$0x3] %v1372
    %v1374 = vld [vmem:[%s13] sm:$0xff]
    %v1375 = vld [vmem:[%s13 + $0x8] sm:$0xff]
    %v1376 = vld [vmem:[%s13 + $0x10] sm:$0xff]
    %v1377 = vld [vmem:[%s13 + $0x18] sm:$0xff]
    %v1378 = vld [vmem:[%s14] sm:$0x1]
    %v1380 = vlaneseq
    %v1381 = vshrl.u32 %v1380, 7
    %v1382 = vsub.s32 0, %v1381
    %v1383 = vrot.slane %v1378, %v1382
    %1385 = vrot.lane.b32.xlu0 %v1343, 64
    %v1386 = vpop.permute.xlu0 %1385
    %v1387 = vsel %vm188, %v1386, 0
    %1389 = vmatprep.subr.mxu0 0.0
    %1390 = vmatpush1.msra.mxu0 %v1374
    %1391 = vmatprep.subr.mxu0 0.0
    %1392 = vmatpush1.msra.mxu0 %v1375
    %1393 = vmatprep.subr.mxu0 0.0
    %1394 = vmatpush1.msra.mxu0 %v1376
    %1395 = vmatprep.subr.mxu0 0.0
    %1396 = vmatpush1.msra.mxu0 %v1377
    %1397 = vmatprep.subr.mxu0 0.0
    %1398 = vmatpush1.msra.mxu0 0.0
    %1399 = vmatprep.subr.mxu0 0.0
    %1400 = vmatpush1.msra.mxu0 0.0
    %1401 = vmatprep.subr.mxu0 0.0
    %1402 = vmatpush1.msra.mxu0 0.0
    %1403 = vmatprep.subr.mxu0 0.0
    %1404 = vmatpush1.msra.mxu0 0.0
    %1405 = vmatprep.subr.mxu0 0.0
    %1406 = vmatpush1.msra.mxu0 0.0
    %1407 = vmatprep.subr.mxu0 0.0
    %1408 = vmatpush1.msra.mxu0 0.0
    %1409 = vmatprep.subr.mxu0 0.0
    %1410 = vmatpush1.msra.mxu0 0.0
    %1411 = vmatprep.subr.mxu0 0.0
    %1412 = vmatpush1.msra.mxu0 0.0
    %1413 = vmatprep.subr.mxu0 0.0
    %1414 = vmatpush1.msra.mxu0 0.0
    %1415 = vmatprep.subr.mxu0 0.0
    %1416 = vmatpush1.msra.mxu0 0.0
    %1417 = vmatprep.subr.mxu0 0.0
    %1418 = vmatpush1.msra.mxu0 0.0
    %1419 = vmatprep.subr.mxu0 0.0
    %1420 = vmatpush1.msra.mxu0 0.0
    %1421 = vmatprep.subr.mxu0 0.0
    %1422 = vmatpush1.msra.mxu0 0.0
    %1423 = vmatprep.subr.mxu0 0.0
    %1424 = vmatpush1.msra.mxu0 0.0
    %1425 = vmatprep.subr.mxu0 0.0
    %1426 = vmatpush1.msra.mxu0 0.0
    %1427 = vmatprep.subr.mxu0 0.0
    %1428 = vmatpush1.msra.mxu0 0.0
    %1429 = vmatprep.subr.mxu0 0.0
    %1430 = vmatpush1.msra.mxu0 0.0
    %1431 = vmatprep.subr.mxu0 0.0
    %1432 = vmatpush1.msra.mxu0 0.0
    %1433 = vmatprep.subr.mxu0 0.0
    %1434 = vmatpush1.msra.mxu0 0.0
    %1435 = vmatprep.subr.mxu0 0.0
    %1436 = vmatpush1.msra.mxu0 0.0
    %1437 = vmatprep.subr.mxu0 0.0
    %1438 = vmatpush1.msra.mxu0 0.0
    %1439 = vmatprep.subr.mxu0 0.0
    %1440 = vmatpush1.msra.mxu0 0.0
    %1441 = vmatprep.subr.mxu0 0.0
    %1442 = vmatpush1.msra.mxu0 0.0
    %1443 = vmatprep.subr.mxu0 0.0
    %1444 = vmatpush1.msra.mxu0 0.0
    %1445 = vmatprep.subr.mxu0 0.0
    %1446 = vmatpush1.msra.mxu0 0.0
    %1447 = vmatprep.subr.mxu0 0.0
    %1448 = vmatpush1.msra.mxu0 0.0
    %1449 = vmatprep.subr.mxu0 0.0
    %1450 = vmatpush1.msra.mxu0 0.0
    %1451 = vmatprep.subr.mxu0 0.0
    %1452 = vmatpush1.msra.mxu0 0.0
    %1453 = vmatprep.mubr.f32.mxu0 0.0
    %1454 = vmatmul.mubr.f32.gmra.mrb[0].mxu0 %v1387
    %v1455 = vpop.f32.mrb[0].mxu0
    %v1456 = vadd.f32 %v1383, %v1455
    %v1457 = vpop.f32.mrb[0].mxu0
    %1458 = vdwg.mxu0
    %vm1459 = vcmask 123904
    %1460 = vst.msk [vmem:[#allocation17] sm:$0x3] %vm1459, %v1456
    // Predicated region
    $region98: #{tpu_custom_call.1} parent=1 // pred_check
      _
    $region99: #{tpu_custom_call.1} parent=1 // pred_check_branch
      %1462 = sbr.rel (0) target = $region101
    $region100: #{tpu_custom_call.1} parent=1 // pred_region
      %s1464 = ssub.s32 32, 32
      %1465 = vsyncadd [#allocation4], %s1464
      %s1467 = sshll.u32 [#allocation17], 4
      %s1468 = int_to_ptr.vmem [resolvable:$true] %s1467
      %1470 = dma.vmem_to_hbm [thread:$0]  %s1468, 32, %s15, [#allocation4]
    $region101: #{tpu_custom_call.1} parent=1 // pred_fallthru
      _
    // Predicated region
    $region102: #{tpu_custom_call.1} parent=1 // pred_check
      _
    $region103: #{tpu_custom_call.1} parent=1 // pred_check_branch
      %1472 = sbr.rel (0) target = $region105
    $region104: #{tpu_custom_call.1} parent=1 // pred_region
      %s1474 = ssub.s32 32, 32
      %1475 = vsyncadd [#allocation19], %s1474
      %s1477 = sshll.u32 [#allocation18], 4
      %s1478 = int_to_ptr.vmem [resolvable:$true] %s1477
      %1480 = dma.vmem_to_hbm [thread:$0]  %s1478, 32, %s16, [#allocation19]
    $region105: #{tpu_custom_call.1} parent=1 // pred_fallthru
      _
    // Predicated region
    $region106: #{tpu_custom_call.1} parent=1 // pred_check
      _
    $region107: #{tpu_custom_call.1} parent=1 // pred_check_branch
      %1482 = sbr.rel (0) target = $region109
    $region108: #{tpu_custom_call.1} parent=1 // pred_region
      %s1484 = ssub.s32 32, 32
      %1485 = vsyncadd [#allocation19], %s1484
      %s1487 = sshll.u32 [#allocation20], 4
      %s1488 = int_to_ptr.vmem [resolvable:$true] %s1487
      %1490 = dma.vmem_to_hbm [thread:$0]  %s1488, 32, %s17, [#allocation19]
    $region109: #{tpu_custom_call.1} parent=1 // pred_fallthru
      _
    // Predicated region
    $region110: #{tpu_custom_call.1} parent=1 // pred_check
      _
    $region111: #{tpu_custom_call.1} parent=1 // pred_check_branch
      %1492 = sbr.rel (0) target = $region113
    $region112: #{tpu_custom_call.1} parent=1 // pred_region
      %1493 = dma.done [#allocation4], 32
    $region113: #{tpu_custom_call.1} parent=1 // pred_fallthru
      _
    // Predicated region
    $region114: #{tpu_custom_call.1} parent=1 // pred_check
      _
    $region115: #{tpu_custom_call.1} parent=1 // pred_check_branch
      %1495 = sbr.rel (0) target = $region117
    $region116: #{tpu_custom_call.1} parent=1 // pred_region
      %1496 = dma.done [#allocation19], 32
    $region117: #{tpu_custom_call.1} parent=1 // pred_fallthru
      _
    // Predicated region
    $region118: #{tpu_custom_call.1} parent=1 // pred_check
      _
    $region119: #{tpu_custom_call.1} parent=1 // pred_check_branch
      %1498 = sbr.rel (0) target = $region121
    $region120: #{tpu_custom_call.1} parent=1 // pred_region
      %1499 = dma.done [#allocation19], 32
    $region121: #{tpu_custom_call.1} parent=1 // pred_fallthru
      _
    %1500 = vsyncpa [#allocation3], 1
    %1501 = vsyncpa [#allocation6], 1
    %1502 = vsyncpa [#allocation9], 1
    %1503 = vsyncpa [#allocation12], 1
    %1504 = vsyncpa [#allocation15], 1
    %1505 = vsyncpa [#allocation4], 1
    %1506 = vsyncpa [#allocation19], 1

</llo_original>
